<compile_context>
chip_gen: v7x
topology: tpu7x:2x2x1
jax: 0.10.0
libtpu: 0.0.40
codegen_flags: <defaults>
</compile_context>

<pallas_src>
import jax
import jax.numpy as jnp
from jax.experimental import pallas as pl
from jax.experimental.pallas import tpu as pltpu  # noqa: F401  (imported per convention)


def get_positional_encoding(seq_len, embedding_dim):
    """JAX port of the torch get_positional_encoding (sin on even ROWS, cos on odd ROWS)."""
    v = jnp.arange(seq_len, dtype=jnp.float32)
    base = jnp.full((embedding_dim,), 1.0 / 10000.0, dtype=jnp.float32)
    poww = (jnp.arange(embedding_dim) // 2).astype(jnp.float32) * 2.0 / embedding_dim
    denom = jnp.power(base, poww)
    res = v[:, None] * denom[None, :]                       # (seq_len, embedding_dim)
    row_is_even = (jnp.arange(seq_len)[:, None] % 2) == 0   # parity over sequence rows
    res = jnp.where(row_is_even, jnp.sin(res), jnp.cos(res))
    return res.astype(jnp.float32)


def _embed_kernel(ids_ref, pos_ref, tbl_ref, out_ref):
    # ids_ref: (B, L*D) int32   — token id replicated across its D output lanes
    # pos_ref: (1, L*D) float32 — flattened positional encoding
    # tbl_ref: (V, L*D) float32 — row v = embedding row v tiled across the L positions
    # out_ref: (B, L*D) float32 — lane-dense output slab
    ids = ids_ref[...]
    tbl = tbl_ref[...]
    acc = jnp.broadcast_to(pos_ref[...], out_ref.shape)     # hoisted out of the loop
    # V is tiny and static: unrolled VPU compare/select/add — no one-hot, no MXU.
    # Note: ids outside [0, V) contribute a zero embedding (nn.Embedding would error).
    for v in range(tbl.shape[0]):
        acc = acc + jnp.where(ids == v, tbl[v:v + 1, :], 0.0)
    out_ref[...] = acc


def prepare_embed_params(positional_embedding, value_embedding_table):
    """One-time parameter prep (hoisted out of the per-call wrapper).

    Returns lane-dense forms:
      pos_flat  : (1, L*D)   — positional encoding flattened row-major
      tbl_tiled : (V, L*D)   — tbl_tiled[v, l*D + d] == value_embedding_table[v, d]
    """
    L, D = positional_embedding.shape
    pos_flat = positional_embedding.reshape(1, L * D).astype(jnp.float32)
    tbl_tiled = jnp.tile(value_embedding_table.astype(jnp.float32), (1, L))
    return pos_flat, tbl_tiled


def embed_layer_forward(x, pos_flat, tbl_tiled):
    B, L = x.shape
    LD = pos_flat.shape[1]
    D = LD // L
    assert L * D == LD

    # Layout plumbing only: replicate each token id across its D output lanes so the
    # kernel is pure lane-dense elementwise work (compiles into the same jit as the call).
    ids_exp = jnp.repeat(x.astype(jnp.int32), D, axis=1)    # (B, L*D)

    # Single invocation, no grid: whole working set (~100 KB) lives in VMEM.
    out_flat = pl.pallas_call(
        _embed_kernel,
        out_shape=jax.ShapeDtypeStruct((B, LD), jnp.float32),
    )(ids_exp, pos_flat, tbl_tiled)

    return out_flat.reshape(B, L, D)


if __name__ == "__main__":
    # Module defaults: dic_size=40, embedding_dim=64, num_embeddings=6
    dic_size, embedding_dim, num_embeddings = 40, 64, 6
    batch = 2

    key = jax.random.PRNGKey(0)
    k_tbl, k_x = jax.random.split(key)

    # nn.Embedding default init: weights ~ N(0, 1), deterministic via PRNGKey(0)
    value_embedding_table = jax.random.normal(
        k_tbl, (num_embeddings, embedding_dim), dtype=jnp.float32)
    positional_embedding = get_positional_encoding(dic_size, embedding_dim)

    x = jax.random.randint(k_x, (batch, dic_size), 0, num_embeddings, dtype=jnp.int32)

    # One-time parameter preparation (done at "module init", not per call).
    pos_flat, tbl_tiled = prepare_embed_params(positional_embedding, value_embedding_table)

    forward = jax.jit(embed_layer_forward)
    out = forward(x, pos_flat, tbl_tiled)
    out = jax.block_until_ready(out)

    # Plain-JAX reference for the PyTorch forward semantics.
    ref = positional_embedding[None, :, :] + value_embedding_table[x]
    assert out.shape == (batch, dic_size, embedding_dim)
    assert out.dtype == jnp.float32
    assert jnp.allclose(out, ref, atol=1e-5, rtol=1e-5)

    print("KERNEL_OK")
</pallas_src>

<mosaic_0001>
module attributes {stable_mosaic.version = 11 : i64} {
  func.func @_embed_kernel(%arg0: memref<2x2560xi32, #tpu.memory_space<vmem>>, %arg1: memref<1x2560xf32, #tpu.memory_space<vmem>>, %arg2: memref<6x2560xf32, #tpu.memory_space<vmem>>, %arg3: memref<2x2560xf32, #tpu.memory_space<vmem>>) attributes {dimension_semantics = [], scalar_prefetch = 0 : i64, scratch_operands = 0 : i64, tpu.core_type = #tpu.core_type<tc>} {
    %c0 = arith.constant 0 : index
    %c0_0 = arith.constant 0 : index
    %0 = vector.load %arg0[%c0, %c0_0] : memref<2x2560xi32, #tpu.memory_space<vmem>>, vector<2x2560xi32>
    %c0_1 = arith.constant 0 : index
    %c0_2 = arith.constant 0 : index
    %1 = vector.load %arg2[%c0_1, %c0_2] : memref<6x2560xf32, #tpu.memory_space<vmem>>, vector<6x2560xf32>
    %c0_3 = arith.constant 0 : index
    %c0_4 = arith.constant 0 : index
    %2 = vector.load %arg1[%c0_3, %c0_4] : memref<1x2560xf32, #tpu.memory_space<vmem>>, vector<1x2560xf32>
    %3 = vector.shape_cast %2 : vector<1x2560xf32> to vector<1x2560xf32>
    %4 = vector.broadcast %3 : vector<1x2560xf32> to vector<2x2560xf32>
    %c0_i32 = arith.constant 0 : i32
    %5 = vector.broadcast %c0_i32 : i32 to vector<2x2560xi32>
    %6 = arith.cmpi eq, %0, %5 : vector<2x2560xi32>
    %7 = vector.extract_strided_slice %1 {offsets = [0, 0], sizes = [1, 2560], strides = [1, 1]} : vector<6x2560xf32> to vector<1x2560xf32>
    %cst = arith.constant 0.000000e+00 : f32
    %8 = vector.shape_cast %7 : vector<1x2560xf32> to vector<1x2560xf32>
    %9 = vector.broadcast %8 : vector<1x2560xf32> to vector<2x2560xf32>
    %10 = vector.broadcast %cst : f32 to vector<2x2560xf32>
    %11 = arith.select %6, %9, %10 : vector<2x2560xi1>, vector<2x2560xf32>
    %12 = arith.addf %4, %11 : vector<2x2560xf32>
    %c1_i32 = arith.constant 1 : i32
    %13 = vector.broadcast %c1_i32 : i32 to vector<2x2560xi32>
    %14 = arith.cmpi eq, %0, %13 : vector<2x2560xi32>
    %15 = vector.extract_strided_slice %1 {offsets = [1, 0], sizes = [1, 2560], strides = [1, 1]} : vector<6x2560xf32> to vector<1x2560xf32>
    %cst_5 = arith.constant 0.000000e+00 : f32
    %16 = vector.shape_cast %15 : vector<1x2560xf32> to vector<1x2560xf32>
    %17 = vector.broadcast %16 : vector<1x2560xf32> to vector<2x2560xf32>
    %18 = vector.broadcast %cst_5 : f32 to vector<2x2560xf32>
    %19 = arith.select %14, %17, %18 : vector<2x2560xi1>, vector<2x2560xf32>
    %20 = arith.addf %12, %19 : vector<2x2560xf32>
    %c2_i32 = arith.constant 2 : i32
    %21 = vector.broadcast %c2_i32 : i32 to vector<2x2560xi32>
    %22 = arith.cmpi eq, %0, %21 : vector<2x2560xi32>
    %23 = vector.extract_strided_slice %1 {offsets = [2, 0], sizes = [1, 2560], strides = [1, 1]} : vector<6x2560xf32> to vector<1x2560xf32>
    %cst_6 = arith.constant 0.000000e+00 : f32
    %24 = vector.shape_cast %23 : vector<1x2560xf32> to vector<1x2560xf32>
    %25 = vector.broadcast %24 : vector<1x2560xf32> to vector<2x2560xf32>
    %26 = vector.broadcast %cst_6 : f32 to vector<2x2560xf32>
    %27 = arith.select %22, %25, %26 : vector<2x2560xi1>, vector<2x2560xf32>
    %28 = arith.addf %20, %27 : vector<2x2560xf32>
    %c3_i32 = arith.constant 3 : i32
    %29 = vector.broadcast %c3_i32 : i32 to vector<2x2560xi32>
    %30 = arith.cmpi eq, %0, %29 : vector<2x2560xi32>
    %31 = vector.extract_strided_slice %1 {offsets = [3, 0], sizes = [1, 2560], strides = [1, 1]} : vector<6x2560xf32> to vector<1x2560xf32>
    %cst_7 = arith.constant 0.000000e+00 : f32
    %32 = vector.shape_cast %31 : vector<1x2560xf32> to vector<1x2560xf32>
    %33 = vector.broadcast %32 : vector<1x2560xf32> to vector<2x2560xf32>
    %34 = vector.broadcast %cst_7 : f32 to vector<2x2560xf32>
    %35 = arith.select %30, %33, %34 : vector<2x2560xi1>, vector<2x2560xf32>
    %36 = arith.addf %28, %35 : vector<2x2560xf32>
    %c4_i32 = arith.constant 4 : i32
    %37 = vector.broadcast %c4_i32 : i32 to vector<2x2560xi32>
    %38 = arith.cmpi eq, %0, %37 : vector<2x2560xi32>
    %39 = vector.extract_strided_slice %1 {offsets = [4, 0], sizes = [1, 2560], strides = [1, 1]} : vector<6x2560xf32> to vector<1x2560xf32>
    %cst_8 = arith.constant 0.000000e+00 : f32
    %40 = vector.shape_cast %39 : vector<1x2560xf32> to vector<1x2560xf32>
    %41 = vector.broadcast %40 : vector<1x2560xf32> to vector<2x2560xf32>
    %42 = vector.broadcast %cst_8 : f32 to vector<2x2560xf32>
    %43 = arith.select %38, %41, %42 : vector<2x2560xi1>, vector<2x2560xf32>
    %44 = arith.addf %36, %43 : vector<2x2560xf32>
    %c5_i32 = arith.constant 5 : i32
    %45 = vector.broadcast %c5_i32 : i32 to vector<2x2560xi32>
    %46 = arith.cmpi eq, %0, %45 : vector<2x2560xi32>
    %47 = vector.extract_strided_slice %1 {offsets = [5, 0], sizes = [1, 2560], strides = [1, 1]} : vector<6x2560xf32> to vector<1x2560xf32>
    %cst_9 = arith.constant 0.000000e+00 : f32
    %48 = vector.shape_cast %47 : vector<1x2560xf32> to vector<1x2560xf32>
    %49 = vector.broadcast %48 : vector<1x2560xf32> to vector<2x2560xf32>
    %50 = vector.broadcast %cst_9 : f32 to vector<2x2560xf32>
    %51 = arith.select %46, %49, %50 : vector<2x2560xi1>, vector<2x2560xf32>
    %52 = arith.addf %44, %51 : vector<2x2560xf32>
    %c0_10 = arith.constant 0 : index
    %c0_11 = arith.constant 0 : index
    %53 = vector.load %arg3[%c0_10, %c0_11] : memref<2x2560xf32, #tpu.memory_space<vmem>>, vector<2x2560xf32>
    tpu.vector_store %arg3[%c0_10, %c0_11], %52 {strides = array<i32>} : memref<2x2560xf32, #tpu.memory_space<vmem>>, vector<2x2560xf32>,
    return
  }
}

</mosaic_0001>

<llo_original>
// kernel: embed_layer_forward.1
$region0: #{embed_layer_forward.1}
  #allocation0 [shape = 'u32[]', space=smem, size = 0x4, offset = 0x4, fixed_abs, tag = 'smem constant byte address 0x4 - core index']
  #allocation1 [shape = 'u32[144,128]{1,0:T(1,128)}', space=vmem, size = 0x12000, scoped, tag = 'internal scratch']
  %s0 = inlined_call_operand.vmem [shape: s32[2,2560], index: 0, kind: input, shape index: {}]
  %s1 = inlined_call_operand.vmem [shape: f32[1,2560], index: 1, kind: input, shape index: {}]
  %s2 = inlined_call_operand.vmem [shape: f32[6,2560], index: 2, kind: input, shape index: {}]
  %s3 = inlined_call_operand.vmem [shape: f32[2,2560], index: 3, kind: output, shape index: {}]
  %s4 = sld [smem:[#allocation0]]
  $region22: #{embed_layer_forward.1} parent=0
    _
  %s6 = ssub.s32 1, %s4
  %s7 = scalar_select 0, %s6, %s4
  // Predicated region
  $region2: #{embed_layer_forward.1} parent=0 // pred_check
    _
  $region3: #{embed_layer_forward.1} parent=0 // pred_check_branch
    %9 = sbr.rel (0) target = $region5
  $region4: #{embed_layer_forward.1} parent=0 // pred_region
    _
  $region5: #{embed_layer_forward.1} parent=0 // pred_fallthru
    _
  // Predicated region
  $region6: #{embed_layer_forward.1} parent=0 // pred_check
    _
  $region7: #{embed_layer_forward.1} parent=0 // pred_check_branch
    %11 = sbr.rel (0) target = $region9
  $region8: #{embed_layer_forward.1} parent=0 // pred_region
    _
  $region9: #{embed_layer_forward.1} parent=0 // pred_fallthru
    _
  // Predicated region
  $region10: #{embed_layer_forward.1} parent=0 // pred_check
    _
  $region11: #{embed_layer_forward.1} parent=0 // pred_check_branch
    %13 = sbr.rel (0) target = $region13
  $region12: #{embed_layer_forward.1} parent=0 // pred_region
    _
  $region13: #{embed_layer_forward.1} parent=0 // pred_fallthru
    _
  %v14 = vld [vmem:[%s0] sm:$0xff]
  %v15 = vld [vmem:[%s0 + $0x8] sm:$0xff]
  %v16 = vld [vmem:[%s0 + $0x10] sm:$0xff]
  %v17 = vld [vmem:[%s0 + $0x18] sm:$0xff]
  %v18 = vld [vmem:[%s0 + $0x20] sm:$0xff]
  %v19 = vld [vmem:[%s2] sm:$0x3f]
  %v20 = vld [vmem:[%s2 + $0x8] sm:$0x3f]
  %v21 = vld [vmem:[%s2 + $0x10] sm:$0x3f]
  %v22 = vld [vmem:[%s2 + $0x18] sm:$0x3f]
  %v23 = vld [vmem:[%s2 + $0x20] sm:$0x3f]
  %v24 = vld [vmem:[%s2 + $0x28] sm:$0x3f]
  %v25 = vld [vmem:[%s2 + $0x30] sm:$0x3f]
  %v26 = vld [vmem:[%s2 + $0x38] sm:$0x3f]
  %v27 = vld [vmem:[%s2 + $0x40] sm:$0x3f]
  %v28 = vld [vmem:[%s2 + $0x48] sm:$0x3f]
  %v29 = vld [vmem:[%s2 + $0x50] sm:$0x3f]
  %v30 = vld [vmem:[%s2 + $0x58] sm:$0x3f]
  %v31 = vld [vmem:[%s2 + $0x60] sm:$0x3f]
  %v32 = vld [vmem:[%s2 + $0x68] sm:$0x3f]
  %v33 = vld [vmem:[%s2 + $0x70] sm:$0x3f]
  %v34 = vld [vmem:[%s2 + $0x78] sm:$0x3f]
  %v35 = vld [vmem:[%s2 + $0x80] sm:$0x3f]
  %v36 = vld [vmem:[%s2 + $0x88] sm:$0x3f]
  %v37 = vld [vmem:[%s2 + $0x90] sm:$0x3f]
  %v38 = vld [vmem:[%s2 + $0x98] sm:$0x3f]
  %v39 = vld [vmem:[%s1] sm:$0xff]
  %v40 = vld [vmem:[%s1 + $0x8] sm:$0xff]
  %v41 = vld [vmem:[%s1 + $0x10] sm:$0xf]
  %v45 = vlaneseq
  %v46 = vshrl.u32 %v45, 7
  %v47 = vsub.s32 0, %v46
  %v48 = vrot.slane %v39, %v47
  %v49 = vlaneseq
  %v50 = vshrl.u32 %v49, 7
  %v51 = vsub.s32 1, %v50
  %v52 = vrot.slane %v39, %v51
  %v53 = vlaneseq
  %v54 = vshrl.u32 %v53, 7
  %v55 = vsub.s32 2, %v54
  %v56 = vrot.slane %v39, %v55
  %v57 = vlaneseq
  %v58 = vshrl.u32 %v57, 7
  %v59 = vsub.s32 3, %v58
  %v60 = vrot.slane %v39, %v59
  %v61 = vlaneseq
  %v62 = vshrl.u32 %v61, 7
  %v63 = vsub.s32 4, %v62
  %v64 = vrot.slane %v39, %v63
  %v65 = vlaneseq
  %v66 = vshrl.u32 %v65, 7
  %v67 = vsub.s32 5, %v66
  %v68 = vrot.slane %v39, %v67
  %v69 = vlaneseq
  %v70 = vshrl.u32 %v69, 7
  %v71 = vsub.s32 6, %v70
  %v72 = vrot.slane %v39, %v71
  %v73 = vlaneseq
  %v74 = vshrl.u32 %v73, 7
  %v75 = vsub.s32 7, %v74
  %v76 = vrot.slane %v39, %v75
  %v77 = vlaneseq
  %v78 = vshrl.u32 %v77, 7
  %v79 = vsub.s32 0, %v78
  %v80 = vrot.slane %v40, %v79
  %v81 = vlaneseq
  %v82 = vshrl.u32 %v81, 7
  %v83 = vsub.s32 1, %v82
  %v84 = vrot.slane %v40, %v83
  %v85 = vlaneseq
  %v86 = vshrl.u32 %v85, 7
  %v87 = vsub.s32 2, %v86
  %v88 = vrot.slane %v40, %v87
  %v89 = vlaneseq
  %v90 = vshrl.u32 %v89, 7
  %v91 = vsub.s32 3, %v90
  %v92 = vrot.slane %v40, %v91
  %v93 = vlaneseq
  %v94 = vshrl.u32 %v93, 7
  %v95 = vsub.s32 4, %v94
  %v96 = vrot.slane %v40, %v95
  %v97 = vlaneseq
  %v98 = vshrl.u32 %v97, 7
  %v99 = vsub.s32 5, %v98
  %v100 = vrot.slane %v40, %v99
  %v101 = vlaneseq
  %v102 = vshrl.u32 %v101, 7
  %v103 = vsub.s32 6, %v102
  %v104 = vrot.slane %v40, %v103
  %v105 = vlaneseq
  %v106 = vshrl.u32 %v105, 7
  %v107 = vsub.s32 7, %v106
  %v108 = vrot.slane %v40, %v107
  %v109 = vlaneseq
  %v110 = vshrl.u32 %v109, 7
  %v111 = vsub.s32 0, %v110
  %v112 = vrot.slane %v41, %v111
  %v113 = vlaneseq
  %v114 = vshrl.u32 %v113, 7
  %v115 = vsub.s32 1, %v114
  %v116 = vrot.slane %v41, %v115
  %v117 = vlaneseq
  %v118 = vshrl.u32 %v117, 7
  %v119 = vsub.s32 2, %v118
  %v120 = vrot.slane %v41, %v119
  %v121 = vlaneseq
  %v122 = vshrl.u32 %v121, 7
  %v123 = vsub.s32 3, %v122
  %v124 = vrot.slane %v41, %v123
  %vm145 = vcmp.eq.s32.totalorder %v14, 0
  %vm146 = vcmp.eq.s32.totalorder %v15, 0
  %vm147 = vcmp.eq.s32.totalorder %v16, 0
  %vm148 = vcmp.eq.s32.totalorder %v17, 0
  %vm149 = vcmp.eq.s32.totalorder %v18, 0
  %v150 = vlaneseq
  %v151 = vshrl.u32 %v150, 7
  %v152 = vsub.s32 0, %v151
  %v153 = vrot.slane %v19, %v152
  %v154 = vlaneseq
  %v155 = vshrl.u32 %v154, 7
  %v156 = vsub.s32 0, %v155
  %v157 = vrot.slane %v20, %v156
  %v158 = vlaneseq
  %v159 = vshrl.u32 %v158, 7
  %v160 = vsub.s32 0, %v159
  %v161 = vrot.slane %v21, %v160
  %v162 = vlaneseq
  %v163 = vshrl.u32 %v162, 7
  %v164 = vsub.s32 0, %v163
  %v165 = vrot.slane %v22, %v164
  %v166 = vlaneseq
  %v167 = vshrl.u32 %v166, 7
  %v168 = vsub.s32 0, %v167
  %v169 = vrot.slane %v23, %v168
  %v170 = vlaneseq
  %v171 = vshrl.u32 %v170, 7
  %v172 = vsub.s32 0, %v171
  %v173 = vrot.slane %v24, %v172
  %v174 = vlaneseq
  %v175 = vshrl.u32 %v174, 7
  %v176 = vsub.s32 0, %v175
  %v177 = vrot.slane %v25, %v176
  %v178 = vlaneseq
  %v179 = vshrl.u32 %v178, 7
  %v180 = vsub.s32 0, %v179
  %v181 = vrot.slane %v26, %v180
  %v182 = vlaneseq
  %v183 = vshrl.u32 %v182, 7
  %v184 = vsub.s32 0, %v183
  %v185 = vrot.slane %v27, %v184
  %v186 = vlaneseq
  %v187 = vshrl.u32 %v186, 7
  %v188 = vsub.s32 0, %v187
  %v189 = vrot.slane %v28, %v188
  %v190 = vlaneseq
  %v191 = vshrl.u32 %v190, 7
  %v192 = vsub.s32 0, %v191
  %v193 = vrot.slane %v29, %v192
  %v194 = vlaneseq
  %v195 = vshrl.u32 %v194, 7
  %v196 = vsub.s32 0, %v195
  %v197 = vrot.slane %v30, %v196
  %v198 = vlaneseq
  %v199 = vshrl.u32 %v198, 7
  %v200 = vsub.s32 0, %v199
  %v201 = vrot.slane %v31, %v200
  %v202 = vlaneseq
  %v203 = vshrl.u32 %v202, 7
  %v204 = vsub.s32 0, %v203
  %v205 = vrot.slane %v32, %v204
  %v206 = vlaneseq
  %v207 = vshrl.u32 %v206, 7
  %v208 = vsub.s32 0, %v207
  %v209 = vrot.slane %v33, %v208
  %v210 = vlaneseq
  %v211 = vshrl.u32 %v210, 7
  %v212 = vsub.s32 0, %v211
  %v213 = vrot.slane %v34, %v212
  %v214 = vlaneseq
  %v215 = vshrl.u32 %v214, 7
  %v216 = vsub.s32 0, %v215
  %v217 = vrot.slane %v35, %v216
  %v218 = vlaneseq
  %v219 = vshrl.u32 %v218, 7
  %v220 = vsub.s32 0, %v219
  %v221 = vrot.slane %v36, %v220
  %v222 = vlaneseq
  %v223 = vshrl.u32 %v222, 7
  %v224 = vsub.s32 0, %v223
  %v225 = vrot.slane %v37, %v224
  %v226 = vlaneseq
  %v227 = vshrl.u32 %v226, 7
  %v228 = vsub.s32 0, %v227
  %v229 = vrot.slane %v38, %v228
  %v250 = vcombine.low %v153, %v157
  %v251 = vcombine.low %v161, %v165
  %v253 = vunpack.c.l.s4 1983009808
  %v254 = vunpack.c.0.s8 %v253
  %v255 = vlaneseq
  %v256 = vshrl.u32 %v255, 7
  %v257 = vsub.s32 %v254, %v256
  %v258 = vrot.slane %v250, %v257
  %v260 = vunpack.c.l.s4 1983009808
  %v261 = vunpack.c.0.s8 %v260
  %v262 = vlaneseq
  %v263 = vshrl.u32 %v262, 7
  %v264 = vsub.s32 %v261, %v263
  %v265 = vrot.slane %v251, %v264
  %v266 = vcombine.low %v258, %v265
  %v267 = vcombine.low %v169, %v173
  %v268 = vcombine.low %v177, %v181
  %v270 = vunpack.c.l.s4 1983009808
  %v271 = vunpack.c.0.s8 %v270
  %v272 = vlaneseq
  %v273 = vshrl.u32 %v272, 7
  %v274 = vsub.s32 %v271, %v273
  %v275 = vrot.slane %v267, %v274
  %v277 = vunpack.c.l.s4 1983009808
  %v278 = vunpack.c.0.s8 %v277
  %v279 = vlaneseq
  %v280 = vshrl.u32 %v279, 7
  %v281 = vsub.s32 %v278, %v280
  %v282 = vrot.slane %v268, %v281
  %v283 = vcombine.low %v275, %v282
  %v284 = vcombine.low %v185, %v189
  %v285 = vcombine.low %v193, %v197
  %v287 = vunpack.c.l.s4 1983009808
  %v288 = vunpack.c.0.s8 %v287
  %v289 = vlaneseq
  %v290 = vshrl.u32 %v289, 7
  %v291 = vsub.s32 %v288, %v290
  %v292 = vrot.slane %v284, %v291
  %v294 = vunpack.c.l.s4 1983009808
  %v295 = vunpack.c.0.s8 %v294
  %v296 = vlaneseq
  %v297 = vshrl.u32 %v296, 7
  %v298 = vsub.s32 %v295, %v297
  %v299 = vrot.slane %v285, %v298
  %v300 = vcombine.low %v292, %v299
  %v301 = vcombine.low %v201, %v205
  %v302 = vcombine.low %v209, %v213
  %v304 = vunpack.c.l.s4 1983009808
  %v305 = vunpack.c.0.s8 %v304
  %v306 = vlaneseq
  %v307 = vshrl.u32 %v306, 7
  %v308 = vsub.s32 %v305, %v307
  %v309 = vrot.slane %v301, %v308
  %v311 = vunpack.c.l.s4 1983009808
  %v312 = vunpack.c.0.s8 %v311
  %v313 = vlaneseq
  %v314 = vshrl.u32 %v313, 7
  %v315 = vsub.s32 %v312, %v314
  %v316 = vrot.slane %v302, %v315
  %v317 = vcombine.low %v309, %v316
  %v318 = vcombine.low %v217, %v221
  %v319 = vcombine.low %v225, %v229
  %v321 = vunpack.c.l.s4 1983009808
  %v322 = vunpack.c.0.s8 %v321
  %v323 = vlaneseq
  %v324 = vshrl.u32 %v323, 7
  %v325 = vsub.s32 %v322, %v324
  %v326 = vrot.slane %v318, %v325
  %v328 = vunpack.c.l.s4 1983009808
  %v329 = vunpack.c.0.s8 %v328
  %v330 = vlaneseq
  %v331 = vshrl.u32 %v330, 7
  %v332 = vsub.s32 %v329, %v331
  %v333 = vrot.slane %v319, %v332
  %v334 = vcombine.low %v326, %v333
  %v340 = vsel %vm145, %v266, 0.0
  %v341 = vsel %vm146, %v283, 0.0
  %v342 = vsel %vm147, %v300, 0.0
  %v343 = vsel %vm148, %v317, 0.0
  %v344 = vsel %vm149, %v334, 0.0
  %v350 = vcombine.high %v340, %v340
  %v352 = vunpack.c.l.s4 1983009808
  %v353 = vunpack.c.0.s8 %v352
  %v354 = vlaneseq
  %v355 = vshrl.u32 %v354, 7
  %v356 = vsub.s32 %v353, %v355
  %v357 = vrot.slane %v340, %v356
  %v359 = vunpack.c.l.s4 1983009808
  %v360 = vunpack.c.0.s8 %v359
  %v361 = vlaneseq
  %v362 = vshrl.u32 %v361, 7
  %v363 = vsub.s32 %v360, %v362
  %v364 = vrot.slane %v350, %v363
  %v365 = vcombine.high %v357, %v357
  %v366 = vcombine.high %v364, %v364
  %v367 = vcombine.high %v341, %v341
  %v369 = vunpack.c.l.s4 1983009808
  %v370 = vunpack.c.0.s8 %v369
  %v371 = vlaneseq
  %v372 = vshrl.u32 %v371, 7
  %v373 = vsub.s32 %v370, %v372
  %v374 = vrot.slane %v341, %v373
  %v376 = vunpack.c.l.s4 1983009808
  %v377 = vunpack.c.0.s8 %v376
  %v378 = vlaneseq
  %v379 = vshrl.u32 %v378, 7
  %v380 = vsub.s32 %v377, %v379
  %v381 = vrot.slane %v367, %v380
  %v382 = vcombine.high %v374, %v374
  %v383 = vcombine.high %v381, %v381
  %v384 = vcombine.high %v342, %v342
  %v386 = vunpack.c.l.s4 1983009808
  %v387 = vunpack.c.0.s8 %v386
  %v388 = vlaneseq
  %v389 = vshrl.u32 %v388, 7
  %v390 = vsub.s32 %v387, %v389
  %v391 = vrot.slane %v342, %v390
  %v393 = vunpack.c.l.s4 1983009808
  %v394 = vunpack.c.0.s8 %v393
  %v395 = vlaneseq
  %v396 = vshrl.u32 %v395, 7
  %v397 = vsub.s32 %v394, %v396
  %v398 = vrot.slane %v384, %v397
  %v399 = vcombine.high %v391, %v391
  %v400 = vcombine.high %v398, %v398
  %v401 = vcombine.high %v343, %v343
  %v403 = vunpack.c.l.s4 1983009808
  %v404 = vunpack.c.0.s8 %v403
  %v405 = vlaneseq
  %v406 = vshrl.u32 %v405, 7
  %v407 = vsub.s32 %v404, %v406
  %v408 = vrot.slane %v343, %v407
  %v410 = vunpack.c.l.s4 1983009808
  %v411 = vunpack.c.0.s8 %v410
  %v412 = vlaneseq
  %v413 = vshrl.u32 %v412, 7
  %v414 = vsub.s32 %v411, %v413
  %v415 = vrot.slane %v401, %v414
  %v416 = vcombine.high %v408, %v408
  %v417 = vcombine.high %v415, %v415
  %v418 = vcombine.high %v344, %v344
  %v420 = vunpack.c.l.s4 1983009808
  %v421 = vunpack.c.0.s8 %v420
  %v422 = vlaneseq
  %v423 = vshrl.u32 %v422, 7
  %v424 = vsub.s32 %v421, %v423
  %v425 = vrot.slane %v344, %v424
  %v427 = vunpack.c.l.s4 1983009808
  %v428 = vunpack.c.0.s8 %v427
  %v429 = vlaneseq
  %v430 = vshrl.u32 %v429, 7
  %v431 = vsub.s32 %v428, %v430
  %v432 = vrot.slane %v418, %v431
  %v433 = vcombine.high %v425, %v425
  %v434 = vcombine.high %v432, %v432
  %v455 = vadd.f32 %v48, %v357
  %v456 = vadd.f32 %v52, %v365
  %v457 = vadd.f32 %v56, %v364
  %v458 = vadd.f32 %v60, %v366
  %v459 = vadd.f32 %v64, %v374
  %v460 = vadd.f32 %v68, %v382
  %v461 = vadd.f32 %v72, %v381
  %v462 = vadd.f32 %v76, %v383
  %v463 = vadd.f32 %v80, %v391
  %v464 = vadd.f32 %v84, %v399
  %v465 = vadd.f32 %v88, %v398
  %v466 = vadd.f32 %v92, %v400
  %v467 = vadd.f32 %v96, %v408
  %v468 = vadd.f32 %v100, %v416
  %v469 = vadd.f32 %v104, %v415
  %v470 = vadd.f32 %v108, %v417
  %v471 = vadd.f32 %v112, %v425
  %v472 = vadd.f32 %v116, %v433
  %v473 = vadd.f32 %v120, %v432
  %v474 = vadd.f32 %v124, %v434
  %vm475 = vcmp.eq.s32.totalorder %v14, 1
  %vm476 = vcmp.eq.s32.totalorder %v15, 1
  %vm477 = vcmp.eq.s32.totalorder %v16, 1
  %vm478 = vcmp.eq.s32.totalorder %v17, 1
  %vm479 = vcmp.eq.s32.totalorder %v18, 1
  %v480 = vlaneseq
  %v481 = vshrl.u32 %v480, 7
  %v482 = vsub.s32 1, %v481
  %v483 = vrot.slane %v19, %v482
  %v484 = vlaneseq
  %v485 = vshrl.u32 %v484, 7
  %v486 = vsub.s32 1, %v485
  %v487 = vrot.slane %v20, %v486
  %v488 = vlaneseq
  %v489 = vshrl.u32 %v488, 7
  %v490 = vsub.s32 1, %v489
  %v491 = vrot.slane %v21, %v490
  %v492 = vlaneseq
  %v493 = vshrl.u32 %v492, 7
  %v494 = vsub.s32 1, %v493
  %v495 = vrot.slane %v22, %v494
  %v496 = vlaneseq
  %v497 = vshrl.u32 %v496, 7
  %v498 = vsub.s32 1, %v497
  %v499 = vrot.slane %v23, %v498
  %v500 = vlaneseq
  %v501 = vshrl.u32 %v500, 7
  %v502 = vsub.s32 1, %v501
  %v503 = vrot.slane %v24, %v502
  %v504 = vlaneseq
  %v505 = vshrl.u32 %v504, 7
  %v506 = vsub.s32 1, %v505
  %v507 = vrot.slane %v25, %v506
  %v508 = vlaneseq
  %v509 = vshrl.u32 %v508, 7
  %v510 = vsub.s32 1, %v509
  %v511 = vrot.slane %v26, %v510
  %v512 = vlaneseq
  %v513 = vshrl.u32 %v512, 7
  %v514 = vsub.s32 1, %v513
  %v515 = vrot.slane %v27, %v514
  %v516 = vlaneseq
  %v517 = vshrl.u32 %v516, 7
  %v518 = vsub.s32 1, %v517
  %v519 = vrot.slane %v28, %v518
  %v520 = vlaneseq
  %v521 = vshrl.u32 %v520, 7
  %v522 = vsub.s32 1, %v521
  %v523 = vrot.slane %v29, %v522
  %v524 = vlaneseq
  %v525 = vshrl.u32 %v524, 7
  %v526 = vsub.s32 1, %v525
  %v527 = vrot.slane %v30, %v526
  %v528 = vlaneseq
  %v529 = vshrl.u32 %v528, 7
  %v530 = vsub.s32 1, %v529
  %v531 = vrot.slane %v31, %v530
  %v532 = vlaneseq
  %v533 = vshrl.u32 %v532, 7
  %v534 = vsub.s32 1, %v533
  %v535 = vrot.slane %v32, %v534
  %v536 = vlaneseq
  %v537 = vshrl.u32 %v536, 7
  %v538 = vsub.s32 1, %v537
  %v539 = vrot.slane %v33, %v538
  %v540 = vlaneseq
  %v541 = vshrl.u32 %v540, 7
  %v542 = vsub.s32 1, %v541
  %v543 = vrot.slane %v34, %v542
  %v544 = vlaneseq
  %v545 = vshrl.u32 %v544, 7
  %v546 = vsub.s32 1, %v545
  %v547 = vrot.slane %v35, %v546
  %v548 = vlaneseq
  %v549 = vshrl.u32 %v548, 7
  %v550 = vsub.s32 1, %v549
  %v551 = vrot.slane %v36, %v550
  %v552 = vlaneseq
  %v553 = vshrl.u32 %v552, 7
  %v554 = vsub.s32 1, %v553
  %v555 = vrot.slane %v37, %v554
  %v556 = vlaneseq
  %v557 = vshrl.u32 %v556, 7
  %v558 = vsub.s32 1, %v557
  %v559 = vrot.slane %v38, %v558
  %v580 = vcombine.low %v483, %v487
  %v581 = vcombine.low %v491, %v495
  %v583 = vunpack.c.l.s4 1983009808
  %v584 = vunpack.c.0.s8 %v583
  %v585 = vlaneseq
  %v586 = vshrl.u32 %v585, 7
  %v587 = vsub.s32 %v584, %v586
  %v588 = vrot.slane %v580, %v587
  %v590 = vunpack.c.l.s4 1983009808
  %v591 = vunpack.c.0.s8 %v590
  %v592 = vlaneseq
  %v593 = vshrl.u32 %v592, 7
  %v594 = vsub.s32 %v591, %v593
  %v595 = vrot.slane %v581, %v594
  %v596 = vcombine.low %v588, %v595
  %v597 = vcombine.low %v499, %v503
  %v598 = vcombine.low %v507, %v511
  %v600 = vunpack.c.l.s4 1983009808
  %v601 = vunpack.c.0.s8 %v600
  %v602 = vlaneseq
  %v603 = vshrl.u32 %v602, 7
  %v604 = vsub.s32 %v601, %v603
  %v605 = vrot.slane %v597, %v604
  %v607 = vunpack.c.l.s4 1983009808
  %v608 = vunpack.c.0.s8 %v607
  %v609 = vlaneseq
  %v610 = vshrl.u32 %v609, 7
  %v611 = vsub.s32 %v608, %v610
  %v612 = vrot.slane %v598, %v611
  %v613 = vcombine.low %v605, %v612
  %v614 = vcombine.low %v515, %v519
  %v615 = vcombine.low %v523, %v527
  %v617 = vunpack.c.l.s4 1983009808
  %v618 = vunpack.c.0.s8 %v617
  %v619 = vlaneseq
  %v620 = vshrl.u32 %v619, 7
  %v621 = vsub.s32 %v618, %v620
  %v622 = vrot.slane %v614, %v621
  %v624 = vunpack.c.l.s4 1983009808
  %v625 = vunpack.c.0.s8 %v624
  %v626 = vlaneseq
  %v627 = vshrl.u32 %v626, 7
  %v628 = vsub.s32 %v625, %v627
  %v629 = vrot.slane %v615, %v628
  %v630 = vcombine.low %v622, %v629
  %v631 = vcombine.low %v531, %v535
  %v632 = vcombine.low %v539, %v543
  %v634 = vunpack.c.l.s4 1983009808
  %v635 = vunpack.c.0.s8 %v634
  %v636 = vlaneseq
  %v637 = vshrl.u32 %v636, 7
  %v638 = vsub.s32 %v635, %v637
  %v639 = vrot.slane %v631, %v638
  %v641 = vunpack.c.l.s4 1983009808
  %v642 = vunpack.c.0.s8 %v641
  %v643 = vlaneseq
  %v644 = vshrl.u32 %v643, 7
  %v645 = vsub.s32 %v642, %v644
  %v646 = vrot.slane %v632, %v645
  %v647 = vcombine.low %v639, %v646
  %v648 = vcombine.low %v547, %v551
  %v649 = vcombine.low %v555, %v559
  %v651 = vunpack.c.l.s4 1983009808
  %v652 = vunpack.c.0.s8 %v651
  %v653 = vlaneseq
  %v654 = vshrl.u32 %v653, 7
  %v655 = vsub.s32 %v652, %v654
  %v656 = vrot.slane %v648, %v655
  %v658 = vunpack.c.l.s4 1983009808
  %v659 = vunpack.c.0.s8 %v658
  %v660 = vlaneseq
  %v661 = vshrl.u32 %v660, 7
  %v662 = vsub.s32 %v659, %v661
  %v663 = vrot.slane %v649, %v662
  %v664 = vcombine.low %v656, %v663
  %v670 = vsel %vm475, %v596, 0.0
  %v671 = vsel %vm476, %v613, 0.0
  %v672 = vsel %vm477, %v630, 0.0
  %v673 = vsel %vm478, %v647, 0.0
  %v674 = vsel %vm479, %v664, 0.0
  %v680 = vcombine.high %v670, %v670
  %v682 = vunpack.c.l.s4 1983009808
  %v683 = vunpack.c.0.s8 %v682
  %v684 = vlaneseq
  %v685 = vshrl.u32 %v684, 7
  %v686 = vsub.s32 %v683, %v685
  %v687 = vrot.slane %v670, %v686
  %v689 = vunpack.c.l.s4 1983009808
  %v690 = vunpack.c.0.s8 %v689
  %v691 = vlaneseq
  %v692 = vshrl.u32 %v691, 7
  %v693 = vsub.s32 %v690, %v692
  %v694 = vrot.slane %v680, %v693
  %v695 = vcombine.high %v687, %v687
  %v696 = vcombine.high %v694, %v694
  %v697 = vcombine.high %v671, %v671
  %v699 = vunpack.c.l.s4 1983009808
  %v700 = vunpack.c.0.s8 %v699
  %v701 = vlaneseq
  %v702 = vshrl.u32 %v701, 7
  %v703 = vsub.s32 %v700, %v702
  %v704 = vrot.slane %v671, %v703
  %v706 = vunpack.c.l.s4 1983009808
  %v707 = vunpack.c.0.s8 %v706
  %v708 = vlaneseq
  %v709 = vshrl.u32 %v708, 7
  %v710 = vsub.s32 %v707, %v709
  %v711 = vrot.slane %v697, %v710
  %v712 = vcombine.high %v704, %v704
  %v713 = vcombine.high %v711, %v711
  %v714 = vcombine.high %v672, %v672
  %v716 = vunpack.c.l.s4 1983009808
  %v717 = vunpack.c.0.s8 %v716
  %v718 = vlaneseq
  %v719 = vshrl.u32 %v718, 7
  %v720 = vsub.s32 %v717, %v719
  %v721 = vrot.slane %v672, %v720
  %v723 = vunpack.c.l.s4 1983009808
  %v724 = vunpack.c.0.s8 %v723
  %v725 = vlaneseq
  %v726 = vshrl.u32 %v725, 7
  %v727 = vsub.s32 %v724, %v726
  %v728 = vrot.slane %v714, %v727
  %v729 = vcombine.high %v721, %v721
  %v730 = vcombine.high %v728, %v728
  %v731 = vcombine.high %v673, %v673
  %v733 = vunpack.c.l.s4 1983009808
  %v734 = vunpack.c.0.s8 %v733
  %v735 = vlaneseq
  %v736 = vshrl.u32 %v735, 7
  %v737 = vsub.s32 %v734, %v736
  %v738 = vrot.slane %v673, %v737
  %v740 = vunpack.c.l.s4 1983009808
  %v741 = vunpack.c.0.s8 %v740
  %v742 = vlaneseq
  %v743 = vshrl.u32 %v742, 7
  %v744 = vsub.s32 %v741, %v743
  %v745 = vrot.slane %v731, %v744
  %v746 = vcombine.high %v738, %v738
  %v747 = vcombine.high %v745, %v745
  %v748 = vcombine.high %v674, %v674
  %v750 = vunpack.c.l.s4 1983009808
  %v751 = vunpack.c.0.s8 %v750
  %v752 = vlaneseq
  %v753 = vshrl.u32 %v752, 7
  %v754 = vsub.s32 %v751, %v753
  %v755 = vrot.slane %v674, %v754
  %v757 = vunpack.c.l.s4 1983009808
  %v758 = vunpack.c.0.s8 %v757
  %v759 = vlaneseq
  %v760 = vshrl.u32 %v759, 7
  %v761 = vsub.s32 %v758, %v760
  %v762 = vrot.slane %v748, %v761
  %v763 = vcombine.high %v755, %v755
  %v764 = vcombine.high %v762, %v762
  %v785 = vadd.f32 %v455, %v687
  %v786 = vadd.f32 %v456, %v695
  %v787 = vadd.f32 %v457, %v694
  %v788 = vadd.f32 %v458, %v696
  %v789 = vadd.f32 %v459, %v704
  %v790 = vadd.f32 %v460, %v712
  %v791 = vadd.f32 %v461, %v711
  %v792 = vadd.f32 %v462, %v713
  %v793 = vadd.f32 %v463, %v721
  %v794 = vadd.f32 %v464, %v729
  %v795 = vadd.f32 %v465, %v728
  %v796 = vadd.f32 %v466, %v730
  %v797 = vadd.f32 %v467, %v738
  %v798 = vadd.f32 %v468, %v746
  %v799 = vadd.f32 %v469, %v745
  %v800 = vadd.f32 %v470, %v747
  %v801 = vadd.f32 %v471, %v755
  %v802 = vadd.f32 %v472, %v763
  %v803 = vadd.f32 %v473, %v762
  %v804 = vadd.f32 %v474, %v764
  %vm805 = vcmp.eq.s32.totalorder %v14, 2
  %vm806 = vcmp.eq.s32.totalorder %v15, 2
  %vm807 = vcmp.eq.s32.totalorder %v16, 2
  %vm808 = vcmp.eq.s32.totalorder %v17, 2
  %vm809 = vcmp.eq.s32.totalorder %v18, 2
  %v810 = vlaneseq
  %v811 = vshrl.u32 %v810, 7
  %v812 = vsub.s32 2, %v811
  %v813 = vrot.slane %v19, %v812
  %v814 = vlaneseq
  %v815 = vshrl.u32 %v814, 7
  %v816 = vsub.s32 2, %v815
  %v817 = vrot.slane %v20, %v816
  %v818 = vlaneseq
  %v819 = vshrl.u32 %v818, 7
  %v820 = vsub.s32 2, %v819
  %v821 = vrot.slane %v21, %v820
  %v822 = vlaneseq
  %v823 = vshrl.u32 %v822, 7
  %v824 = vsub.s32 2, %v823
  %v825 = vrot.slane %v22, %v824
  %v826 = vlaneseq
  %v827 = vshrl.u32 %v826, 7
  %v828 = vsub.s32 2, %v827
  %v829 = vrot.slane %v23, %v828
  %v830 = vlaneseq
  %v831 = vshrl.u32 %v830, 7
  %v832 = vsub.s32 2, %v831
  %v833 = vrot.slane %v24, %v832
  %v834 = vlaneseq
  %v835 = vshrl.u32 %v834, 7
  %v836 = vsub.s32 2, %v835
  %v837 = vrot.slane %v25, %v836
  %v838 = vlaneseq
  %v839 = vshrl.u32 %v838, 7
  %v840 = vsub.s32 2, %v839
  %v841 = vrot.slane %v26, %v840
  %v842 = vlaneseq
  %v843 = vshrl.u32 %v842, 7
  %v844 = vsub.s32 2, %v843
  %v845 = vrot.slane %v27, %v844
  %v846 = vlaneseq
  %v847 = vshrl.u32 %v846, 7
  %v848 = vsub.s32 2, %v847
  %v849 = vrot.slane %v28, %v848
  %v850 = vlaneseq
  %v851 = vshrl.u32 %v850, 7
  %v852 = vsub.s32 2, %v851
  %v853 = vrot.slane %v29, %v852
  %v854 = vlaneseq
  %v855 = vshrl.u32 %v854, 7
  %v856 = vsub.s32 2, %v855
  %v857 = vrot.slane %v30, %v856
  %v858 = vlaneseq
  %v859 = vshrl.u32 %v858, 7
  %v860 = vsub.s32 2, %v859
  %v861 = vrot.slane %v31, %v860
  %v862 = vlaneseq
  %v863 = vshrl.u32 %v862, 7
  %v864 = vsub.s32 2, %v863
  %v865 = vrot.slane %v32, %v864
  %v866 = vlaneseq
  %v867 = vshrl.u32 %v866, 7
  %v868 = vsub.s32 2, %v867
  %v869 = vrot.slane %v33, %v868
  %v870 = vlaneseq
  %v871 = vshrl.u32 %v870, 7
  %v872 = vsub.s32 2, %v871
  %v873 = vrot.slane %v34, %v872
  %v874 = vlaneseq
  %v875 = vshrl.u32 %v874, 7
  %v876 = vsub.s32 2, %v875
  %v877 = vrot.slane %v35, %v876
  %v878 = vlaneseq
  %v879 = vshrl.u32 %v878, 7
  %v880 = vsub.s32 2, %v879
  %v881 = vrot.slane %v36, %v880
  %v882 = vlaneseq
  %v883 = vshrl.u32 %v882, 7
  %v884 = vsub.s32 2, %v883
  %v885 = vrot.slane %v37, %v884
  %v886 = vlaneseq
  %v887 = vshrl.u32 %v886, 7
  %v888 = vsub.s32 2, %v887
  %v889 = vrot.slane %v38, %v888
  %v910 = vcombine.low %v813, %v817
  %v911 = vcombine.low %v821, %v825
  %v913 = vunpack.c.l.s4 1983009808
  %v914 = vunpack.c.0.s8 %v913
  %v915 = vlaneseq
  %v916 = vshrl.u32 %v915, 7
  %v917 = vsub.s32 %v914, %v916
  %v918 = vrot.slane %v910, %v917
  %v920 = vunpack.c.l.s4 1983009808
  %v921 = vunpack.c.0.s8 %v920
  %v922 = vlaneseq
  %v923 = vshrl.u32 %v922, 7
  %v924 = vsub.s32 %v921, %v923
  %v925 = vrot.slane %v911, %v924
  %v926 = vcombine.low %v918, %v925
  %v927 = vcombine.low %v829, %v833
  %v928 = vcombine.low %v837, %v841
  %v930 = vunpack.c.l.s4 1983009808
  %v931 = vunpack.c.0.s8 %v930
  %v932 = vlaneseq
  %v933 = vshrl.u32 %v932, 7
  %v934 = vsub.s32 %v931, %v933
  %v935 = vrot.slane %v927, %v934
  %v937 = vunpack.c.l.s4 1983009808
  %v938 = vunpack.c.0.s8 %v937
  %v939 = vlaneseq
  %v940 = vshrl.u32 %v939, 7
  %v941 = vsub.s32 %v938, %v940
  %v942 = vrot.slane %v928, %v941
  %v943 = vcombine.low %v935, %v942
  %v944 = vcombine.low %v845, %v849
  %v945 = vcombine.low %v853, %v857
  %v947 = vunpack.c.l.s4 1983009808
  %v948 = vunpack.c.0.s8 %v947
  %v949 = vlaneseq
  %v950 = vshrl.u32 %v949, 7
  %v951 = vsub.s32 %v948, %v950
  %v952 = vrot.slane %v944, %v951
  %v954 = vunpack.c.l.s4 1983009808
  %v955 = vunpack.c.0.s8 %v954
  %v956 = vlaneseq
  %v957 = vshrl.u32 %v956, 7
  %v958 = vsub.s32 %v955, %v957
  %v959 = vrot.slane %v945, %v958
  %v960 = vcombine.low %v952, %v959
  %v961 = vcombine.low %v861, %v865
  %v962 = vcombine.low %v869, %v873
  %v964 = vunpack.c.l.s4 1983009808
  %v965 = vunpack.c.0.s8 %v964
  %v966 = vlaneseq
  %v967 = vshrl.u32 %v966, 7
  %v968 = vsub.s32 %v965, %v967
  %v969 = vrot.slane %v961, %v968
  %v971 = vunpack.c.l.s4 1983009808
  %v972 = vunpack.c.0.s8 %v971
  %v973 = vlaneseq
  %v974 = vshrl.u32 %v973, 7
  %v975 = vsub.s32 %v972, %v974
  %v976 = vrot.slane %v962, %v975
  %v977 = vcombine.low %v969, %v976
  %v978 = vcombine.low %v877, %v881
  %v979 = vcombine.low %v885, %v889
  %v981 = vunpack.c.l.s4 1983009808
  %v982 = vunpack.c.0.s8 %v981
  %v983 = vlaneseq
  %v984 = vshrl.u32 %v983, 7
  %v985 = vsub.s32 %v982, %v984
  %v986 = vrot.slane %v978, %v985
  %v988 = vunpack.c.l.s4 1983009808
  %v989 = vunpack.c.0.s8 %v988
  %v990 = vlaneseq
  %v991 = vshrl.u32 %v990, 7
  %v992 = vsub.s32 %v989, %v991
  %v993 = vrot.slane %v979, %v992
  %v994 = vcombine.low %v986, %v993
  %v1000 = vsel %vm805, %v926, 0.0
  %v1001 = vsel %vm806, %v943, 0.0
  %v1002 = vsel %vm807, %v960, 0.0
  %v1003 = vsel %vm808, %v977, 0.0
  %v1004 = vsel %vm809, %v994, 0.0
  %v1010 = vcombine.high %v1000, %v1000
  %v1012 = vunpack.c.l.s4 1983009808
  %v1013 = vunpack.c.0.s8 %v1012
  %v1014 = vlaneseq
  %v1015 = vshrl.u32 %v1014, 7
  %v1016 = vsub.s32 %v1013, %v1015
  %v1017 = vrot.slane %v1000, %v1016
  %v1019 = vunpack.c.l.s4 1983009808
  %v1020 = vunpack.c.0.s8 %v1019
  %v1021 = vlaneseq
  %v1022 = vshrl.u32 %v1021, 7
  %v1023 = vsub.s32 %v1020, %v1022
  %v1024 = vrot.slane %v1010, %v1023
  %v1025 = vcombine.high %v1017, %v1017
  %v1026 = vcombine.high %v1024, %v1024
  %v1027 = vcombine.high %v1001, %v1001
  %v1029 = vunpack.c.l.s4 1983009808
  %v1030 = vunpack.c.0.s8 %v1029
  %v1031 = vlaneseq
  %v1032 = vshrl.u32 %v1031, 7
  %v1033 = vsub.s32 %v1030, %v1032
  %v1034 = vrot.slane %v1001, %v1033
  %v1036 = vunpack.c.l.s4 1983009808
  %v1037 = vunpack.c.0.s8 %v1036
  %v1038 = vlaneseq
  %v1039 = vshrl.u32 %v1038, 7
  %v1040 = vsub.s32 %v1037, %v1039
  %v1041 = vrot.slane %v1027, %v1040
  %v1042 = vcombine.high %v1034, %v1034
  %v1043 = vcombine.high %v1041, %v1041
  %v1044 = vcombine.high %v1002, %v1002
  %v1046 = vunpack.c.l.s4 1983009808
  %v1047 = vunpack.c.0.s8 %v1046
  %v1048 = vlaneseq
  %v1049 = vshrl.u32 %v1048, 7
  %v1050 = vsub.s32 %v1047, %v1049
  %v1051 = vrot.slane %v1002, %v1050
  %v1053 = vunpack.c.l.s4 1983009808
  %v1054 = vunpack.c.0.s8 %v1053
  %v1055 = vlaneseq
  %v1056 = vshrl.u32 %v1055, 7
  %v1057 = vsub.s32 %v1054, %v1056
  %v1058 = vrot.slane %v1044, %v1057
  %v1059 = vcombine.high %v1051, %v1051
  %v1060 = vcombine.high %v1058, %v1058
  %v1061 = vcombine.high %v1003, %v1003
  %v1063 = vunpack.c.l.s4 1983009808
  %v1064 = vunpack.c.0.s8 %v1063
  %v1065 = vlaneseq
  %v1066 = vshrl.u32 %v1065, 7
  %v1067 = vsub.s32 %v1064, %v1066
  %v1068 = vrot.slane %v1003, %v1067
  %v1070 = vunpack.c.l.s4 1983009808
  %v1071 = vunpack.c.0.s8 %v1070
  %v1072 = vlaneseq
  %v1073 = vshrl.u32 %v1072, 7
  %v1074 = vsub.s32 %v1071, %v1073
  %v1075 = vrot.slane %v1061, %v1074
  %v1076 = vcombine.high %v1068, %v1068
  %v1077 = vcombine.high %v1075, %v1075
  %v1078 = vcombine.high %v1004, %v1004
  %v1080 = vunpack.c.l.s4 1983009808
  %v1081 = vunpack.c.0.s8 %v1080
  %v1082 = vlaneseq
  %v1083 = vshrl.u32 %v1082, 7
  %v1084 = vsub.s32 %v1081, %v1083
  %v1085 = vrot.slane %v1004, %v1084
  %v1087 = vunpack.c.l.s4 1983009808
  %v1088 = vunpack.c.0.s8 %v1087
  %v1089 = vlaneseq
  %v1090 = vshrl.u32 %v1089, 7
  %v1091 = vsub.s32 %v1088, %v1090
  %v1092 = vrot.slane %v1078, %v1091
  %v1093 = vcombine.high %v1085, %v1085
  %v1094 = vcombine.high %v1092, %v1092
  %v1115 = vadd.f32 %v785, %v1017
  %v1116 = vadd.f32 %v786, %v1025
  %v1117 = vadd.f32 %v787, %v1024
  %v1118 = vadd.f32 %v788, %v1026
  %v1119 = vadd.f32 %v789, %v1034
  %v1120 = vadd.f32 %v790, %v1042
  %v1121 = vadd.f32 %v791, %v1041
  %v1122 = vadd.f32 %v792, %v1043
  %v1123 = vadd.f32 %v793, %v1051
  %v1124 = vadd.f32 %v794, %v1059
  %v1125 = vadd.f32 %v795, %v1058
  %v1126 = vadd.f32 %v796, %v1060
  %v1127 = vadd.f32 %v797, %v1068
  %v1128 = vadd.f32 %v798, %v1076
  %v1129 = vadd.f32 %v799, %v1075
  %v1130 = vadd.f32 %v800, %v1077
  %v1131 = vadd.f32 %v801, %v1085
  %v1132 = vadd.f32 %v802, %v1093
  %v1133 = vadd.f32 %v803, %v1092
  %v1134 = vadd.f32 %v804, %v1094
  %vm1135 = vcmp.eq.s32.totalorder %v14, 3
  %vm1136 = vcmp.eq.s32.totalorder %v15, 3
  %vm1137 = vcmp.eq.s32.totalorder %v16, 3
  %vm1138 = vcmp.eq.s32.totalorder %v17, 3
  %vm1139 = vcmp.eq.s32.totalorder %v18, 3
  %v1140 = vlaneseq
  %v1141 = vshrl.u32 %v1140, 7
  %v1142 = vsub.s32 3, %v1141
  %v1143 = vrot.slane %v19, %v1142
  %v1144 = vlaneseq
  %v1145 = vshrl.u32 %v1144, 7
  %v1146 = vsub.s32 3, %v1145
  %v1147 = vrot.slane %v20, %v1146
  %v1148 = vlaneseq
  %v1149 = vshrl.u32 %v1148, 7
  %v1150 = vsub.s32 3, %v1149
  %v1151 = vrot.slane %v21, %v1150
  %v1152 = vlaneseq
  %v1153 = vshrl.u32 %v1152, 7
  %v1154 = vsub.s32 3, %v1153
  %v1155 = vrot.slane %v22, %v1154
  %v1156 = vlaneseq
  %v1157 = vshrl.u32 %v1156, 7
  %v1158 = vsub.s32 3, %v1157
  %v1159 = vrot.slane %v23, %v1158
  %v1160 = vlaneseq
  %v1161 = vshrl.u32 %v1160, 7
  %v1162 = vsub.s32 3, %v1161
  %v1163 = vrot.slane %v24, %v1162
  %v1164 = vlaneseq
  %v1165 = vshrl.u32 %v1164, 7
  %v1166 = vsub.s32 3, %v1165
  %v1167 = vrot.slane %v25, %v1166
  %v1168 = vlaneseq
  %v1169 = vshrl.u32 %v1168, 7
  %v1170 = vsub.s32 3, %v1169
  %v1171 = vrot.slane %v26, %v1170
  %v1172 = vlaneseq
  %v1173 = vshrl.u32 %v1172, 7
  %v1174 = vsub.s32 3, %v1173
  %v1175 = vrot.slane %v27, %v1174
  %v1176 = vlaneseq
  %v1177 = vshrl.u32 %v1176, 7
  %v1178 = vsub.s32 3, %v1177
  %v1179 = vrot.slane %v28, %v1178
  %v1180 = vlaneseq
  %v1181 = vshrl.u32 %v1180, 7
  %v1182 = vsub.s32 3, %v1181
  %v1183 = vrot.slane %v29, %v1182
  %v1184 = vlaneseq
  %v1185 = vshrl.u32 %v1184, 7
  %v1186 = vsub.s32 3, %v1185
  %v1187 = vrot.slane %v30, %v1186
  %v1188 = vlaneseq
  %v1189 = vshrl.u32 %v1188, 7
  %v1190 = vsub.s32 3, %v1189
  %v1191 = vrot.slane %v31, %v1190
  %v1192 = vlaneseq
  %v1193 = vshrl.u32 %v1192, 7
  %v1194 = vsub.s32 3, %v1193
  %v1195 = vrot.slane %v32, %v1194
  %v1196 = vlaneseq
  %v1197 = vshrl.u32 %v1196, 7
  %v1198 = vsub.s32 3, %v1197
  %v1199 = vrot.slane %v33, %v1198
  %v1200 = vlaneseq
  %v1201 = vshrl.u32 %v1200, 7
  %v1202 = vsub.s32 3, %v1201
  %v1203 = vrot.slane %v34, %v1202
  %v1204 = vlaneseq
  %v1205 = vshrl.u32 %v1204, 7
  %v1206 = vsub.s32 3, %v1205
  %v1207 = vrot.slane %v35, %v1206
  %v1208 = vlaneseq
  %v1209 = vshrl.u32 %v1208, 7
  %v1210 = vsub.s32 3, %v1209
  %v1211 = vrot.slane %v36, %v1210
  %v1212 = vlaneseq
  %v1213 = vshrl.u32 %v1212, 7
  %v1214 = vsub.s32 3, %v1213
  %v1215 = vrot.slane %v37, %v1214
  %v1216 = vlaneseq
  %v1217 = vshrl.u32 %v1216, 7
  %v1218 = vsub.s32 3, %v1217
  %v1219 = vrot.slane %v38, %v1218
  %v1240 = vcombine.low %v1143, %v1147
  %v1241 = vcombine.low %v1151, %v1155
  %v1243 = vunpack.c.l.s4 1983009808
  %v1244 = vunpack.c.0.s8 %v1243
  %v1245 = vlaneseq
  %v1246 = vshrl.u32 %v1245, 7
  %v1247 = vsub.s32 %v1244, %v1246
  %v1248 = vrot.slane %v1240, %v1247
  %v1250 = vunpack.c.l.s4 1983009808
  %v1251 = vunpack.c.0.s8 %v1250
  %v1252 = vlaneseq
  %v1253 = vshrl.u32 %v1252, 7
  %v1254 = vsub.s32 %v1251, %v1253
  %v1255 = vrot.slane %v1241, %v1254
  %v1256 = vcombine.low %v1248, %v1255
  %v1257 = vcombine.low %v1159, %v1163
  %v1258 = vcombine.low %v1167, %v1171
  %v1260 = vunpack.c.l.s4 1983009808
  %v1261 = vunpack.c.0.s8 %v1260
  %v1262 = vlaneseq
  %v1263 = vshrl.u32 %v1262, 7
  %v1264 = vsub.s32 %v1261, %v1263
  %v1265 = vrot.slane %v1257, %v1264
  %v1267 = vunpack.c.l.s4 1983009808
  %v1268 = vunpack.c.0.s8 %v1267
  %v1269 = vlaneseq
  %v1270 = vshrl.u32 %v1269, 7
  %v1271 = vsub.s32 %v1268, %v1270
  %v1272 = vrot.slane %v1258, %v1271
  %v1273 = vcombine.low %v1265, %v1272
  %v1274 = vcombine.low %v1175, %v1179
  %v1275 = vcombine.low %v1183, %v1187
  %v1277 = vunpack.c.l.s4 1983009808
  %v1278 = vunpack.c.0.s8 %v1277
  %v1279 = vlaneseq
  %v1280 = vshrl.u32 %v1279, 7
  %v1281 = vsub.s32 %v1278, %v1280
  %v1282 = vrot.slane %v1274, %v1281
  %v1284 = vunpack.c.l.s4 1983009808
  %v1285 = vunpack.c.0.s8 %v1284
  %v1286 = vlaneseq
  %v1287 = vshrl.u32 %v1286, 7
  %v1288 = vsub.s32 %v1285, %v1287
  %v1289 = vrot.slane %v1275, %v1288
  %v1290 = vcombine.low %v1282, %v1289
  %v1291 = vcombine.low %v1191, %v1195
  %v1292 = vcombine.low %v1199, %v1203
  %v1294 = vunpack.c.l.s4 1983009808
  %v1295 = vunpack.c.0.s8 %v1294
  %v1296 = vlaneseq
  %v1297 = vshrl.u32 %v1296, 7
  %v1298 = vsub.s32 %v1295, %v1297
  %v1299 = vrot.slane %v1291, %v1298
  %v1301 = vunpack.c.l.s4 1983009808
  %v1302 = vunpack.c.0.s8 %v1301
  %v1303 = vlaneseq
  %v1304 = vshrl.u32 %v1303, 7
  %v1305 = vsub.s32 %v1302, %v1304
  %v1306 = vrot.slane %v1292, %v1305
  %v1307 = vcombine.low %v1299, %v1306
  %v1308 = vcombine.low %v1207, %v1211
  %v1309 = vcombine.low %v1215, %v1219
  %v1311 = vunpack.c.l.s4 1983009808
  %v1312 = vunpack.c.0.s8 %v1311
  %v1313 = vlaneseq
  %v1314 = vshrl.u32 %v1313, 7
  %v1315 = vsub.s32 %v1312, %v1314
  %v1316 = vrot.slane %v1308, %v1315
  %v1318 = vunpack.c.l.s4 1983009808
  %v1319 = vunpack.c.0.s8 %v1318
  %v1320 = vlaneseq
  %v1321 = vshrl.u32 %v1320, 7
  %v1322 = vsub.s32 %v1319, %v1321
  %v1323 = vrot.slane %v1309, %v1322
  %v1324 = vcombine.low %v1316, %v1323
  %v1330 = vsel %vm1135, %v1256, 0.0
  %v1331 = vsel %vm1136, %v1273, 0.0
  %v1332 = vsel %vm1137, %v1290, 0.0
  %v1333 = vsel %vm1138, %v1307, 0.0
  %v1334 = vsel %vm1139, %v1324, 0.0
  %v1340 = vcombine.high %v1330, %v1330
  %v1342 = vunpack.c.l.s4 1983009808
  %v1343 = vunpack.c.0.s8 %v1342
  %v1344 = vlaneseq
  %v1345 = vshrl.u32 %v1344, 7
  %v1346 = vsub.s32 %v1343, %v1345
  %v1347 = vrot.slane %v1330, %v1346
  %v1349 = vunpack.c.l.s4 1983009808
  %v1350 = vunpack.c.0.s8 %v1349
  %v1351 = vlaneseq
  %v1352 = vshrl.u32 %v1351, 7
  %v1353 = vsub.s32 %v1350, %v1352
  %v1354 = vrot.slane %v1340, %v1353
  %v1355 = vcombine.high %v1347, %v1347
  %v1356 = vcombine.high %v1354, %v1354
  %v1357 = vcombine.high %v1331, %v1331
  %v1359 = vunpack.c.l.s4 1983009808
  %v1360 = vunpack.c.0.s8 %v1359
  %v1361 = vlaneseq
  %v1362 = vshrl.u32 %v1361, 7
  %v1363 = vsub.s32 %v1360, %v1362
  %v1364 = vrot.slane %v1331, %v1363
  %v1366 = vunpack.c.l.s4 1983009808
  %v1367 = vunpack.c.0.s8 %v1366
  %v1368 = vlaneseq
  %v1369 = vshrl.u32 %v1368, 7
  %v1370 = vsub.s32 %v1367, %v1369
  %v1371 = vrot.slane %v1357, %v1370
  %v1372 = vcombine.high %v1364, %v1364
  %v1373 = vcombine.high %v1371, %v1371
  %v1374 = vcombine.high %v1332, %v1332
  %v1376 = vunpack.c.l.s4 1983009808
  %v1377 = vunpack.c.0.s8 %v1376
  %v1378 = vlaneseq
  %v1379 = vshrl.u32 %v1378, 7
  %v1380 = vsub.s32 %v1377, %v1379
  %v1381 = vrot.slane %v1332, %v1380
  %v1383 = vunpack.c.l.s4 1983009808
  %v1384 = vunpack.c.0.s8 %v1383
  %v1385 = vlaneseq
  %v1386 = vshrl.u32 %v1385, 7
  %v1387 = vsub.s32 %v1384, %v1386
  %v1388 = vrot.slane %v1374, %v1387
  %v1389 = vcombine.high %v1381, %v1381
  %v1390 = vcombine.high %v1388, %v1388
  %v1391 = vcombine.high %v1333, %v1333
  %v1393 = vunpack.c.l.s4 1983009808
  %v1394 = vunpack.c.0.s8 %v1393
  %v1395 = vlaneseq
  %v1396 = vshrl.u32 %v1395, 7
  %v1397 = vsub.s32 %v1394, %v1396
  %v1398 = vrot.slane %v1333, %v1397
  %v1400 = vunpack.c.l.s4 1983009808
  %v1401 = vunpack.c.0.s8 %v1400
  %v1402 = vlaneseq
  %v1403 = vshrl.u32 %v1402, 7
  %v1404 = vsub.s32 %v1401, %v1403
  %v1405 = vrot.slane %v1391, %v1404
  %v1406 = vcombine.high %v1398, %v1398
  %v1407 = vcombine.high %v1405, %v1405
  %v1408 = vcombine.high %v1334, %v1334
  %v1410 = vunpack.c.l.s4 1983009808
  %v1411 = vunpack.c.0.s8 %v1410
  %v1412 = vlaneseq
  %v1413 = vshrl.u32 %v1412, 7
  %v1414 = vsub.s32 %v1411, %v1413
  %v1415 = vrot.slane %v1334, %v1414
  %v1417 = vunpack.c.l.s4 1983009808
  %v1418 = vunpack.c.0.s8 %v1417
  %v1419 = vlaneseq
  %v1420 = vshrl.u32 %v1419, 7
  %v1421 = vsub.s32 %v1418, %v1420
  %v1422 = vrot.slane %v1408, %v1421
  %v1423 = vcombine.high %v1415, %v1415
  %v1424 = vcombine.high %v1422, %v1422
  %v1445 = vadd.f32 %v1115, %v1347
  %v1446 = vadd.f32 %v1116, %v1355
  %v1447 = vadd.f32 %v1117, %v1354
  %v1448 = vadd.f32 %v1118, %v1356
  %v1449 = vadd.f32 %v1119, %v1364
  %v1450 = vadd.f32 %v1120, %v1372
  %v1451 = vadd.f32 %v1121, %v1371
  %v1452 = vadd.f32 %v1122, %v1373
  %v1453 = vadd.f32 %v1123, %v1381
  %v1454 = vadd.f32 %v1124, %v1389
  %v1455 = vadd.f32 %v1125, %v1388
  %v1456 = vadd.f32 %v1126, %v1390
  %v1457 = vadd.f32 %v1127, %v1398
  %v1458 = vadd.f32 %v1128, %v1406
  %v1459 = vadd.f32 %v1129, %v1405
  %v1460 = vadd.f32 %v1130, %v1407
  %v1461 = vadd.f32 %v1131, %v1415
  %v1462 = vadd.f32 %v1132, %v1423
  %v1463 = vadd.f32 %v1133, %v1422
  %v1464 = vadd.f32 %v1134, %v1424
  %vm1465 = vcmp.eq.s32.totalorder %v14, 4
  %vm1466 = vcmp.eq.s32.totalorder %v15, 4
  %vm1467 = vcmp.eq.s32.totalorder %v16, 4
  %vm1468 = vcmp.eq.s32.totalorder %v17, 4
  %vm1469 = vcmp.eq.s32.totalorder %v18, 4
  %v1470 = vlaneseq
  %v1471 = vshrl.u32 %v1470, 7
  %v1472 = vsub.s32 4, %v1471
  %v1473 = vrot.slane %v19, %v1472
  %v1474 = vlaneseq
  %v1475 = vshrl.u32 %v1474, 7
  %v1476 = vsub.s32 4, %v1475
  %v1477 = vrot.slane %v20, %v1476
  %v1478 = vlaneseq
  %v1479 = vshrl.u32 %v1478, 7
  %v1480 = vsub.s32 4, %v1479
  %v1481 = vrot.slane %v21, %v1480
  %v1482 = vlaneseq
  %v1483 = vshrl.u32 %v1482, 7
  %v1484 = vsub.s32 4, %v1483
  %v1485 = vrot.slane %v22, %v1484
  %v1486 = vlaneseq
  %v1487 = vshrl.u32 %v1486, 7
  %v1488 = vsub.s32 4, %v1487
  %v1489 = vrot.slane %v23, %v1488
  %v1490 = vlaneseq
  %v1491 = vshrl.u32 %v1490, 7
  %v1492 = vsub.s32 4, %v1491
  %v1493 = vrot.slane %v24, %v1492
  %v1494 = vlaneseq
  %v1495 = vshrl.u32 %v1494, 7
  %v1496 = vsub.s32 4, %v1495
  %v1497 = vrot.slane %v25, %v1496
  %v1498 = vlaneseq
  %v1499 = vshrl.u32 %v1498, 7
  %v1500 = vsub.s32 4, %v1499
  %v1501 = vrot.slane %v26, %v1500
  %v1502 = vlaneseq
  %v1503 = vshrl.u32 %v1502, 7
  %v1504 = vsub.s32 4, %v1503
  %v1505 = vrot.slane %v27, %v1504
  %v1506 = vlaneseq
  %v1507 = vshrl.u32 %v1506, 7
  %v1508 = vsub.s32 4, %v1507
  %v1509 = vrot.slane %v28, %v1508
  %v1510 = vlaneseq
  %v1511 = vshrl.u32 %v1510, 7
  %v1512 = vsub.s32 4, %v1511
  %v1513 = vrot.slane %v29, %v1512
  %v1514 = vlaneseq
  %v1515 = vshrl.u32 %v1514, 7
  %v1516 = vsub.s32 4, %v1515
  %v1517 = vrot.slane %v30, %v1516
  %v1518 = vlaneseq
  %v1519 = vshrl.u32 %v1518, 7
  %v1520 = vsub.s32 4, %v1519
  %v1521 = vrot.slane %v31, %v1520
  %v1522 = vlaneseq
  %v1523 = vshrl.u32 %v1522, 7
  %v1524 = vsub.s32 4, %v1523
  %v1525 = vrot.slane %v32, %v1524
  %v1526 = vlaneseq
  %v1527 = vshrl.u32 %v1526, 7
  %v1528 = vsub.s32 4, %v1527
  %v1529 = vrot.slane %v33, %v1528
  %v1530 = vlaneseq
  %v1531 = vshrl.u32 %v1530, 7
  %v1532 = vsub.s32 4, %v1531
  %v1533 = vrot.slane %v34, %v1532
  %v1534 = vlaneseq
  %v1535 = vshrl.u32 %v1534, 7
  %v1536 = vsub.s32 4, %v1535
  %v1537 = vrot.slane %v35, %v1536
  %v1538 = vlaneseq
  %v1539 = vshrl.u32 %v1538, 7
  %v1540 = vsub.s32 4, %v1539
  %v1541 = vrot.slane %v36, %v1540
  %v1542 = vlaneseq
  %v1543 = vshrl.u32 %v1542, 7
  %v1544 = vsub.s32 4, %v1543
  %v1545 = vrot.slane %v37, %v1544
  %v1546 = vlaneseq
  %v1547 = vshrl.u32 %v1546, 7
  %v1548 = vsub.s32 4, %v1547
  %v1549 = vrot.slane %v38, %v1548
  %v1570 = vcombine.low %v1473, %v1477
  %v1571 = vcombine.low %v1481, %v1485
  %v1573 = vunpack.c.l.s4 1983009808
  %v1574 = vunpack.c.0.s8 %v1573
  %v1575 = vlaneseq
  %v1576 = vshrl.u32 %v1575, 7
  %v1577 = vsub.s32 %v1574, %v1576
  %v1578 = vrot.slane %v1570, %v1577
  %v1580 = vunpack.c.l.s4 1983009808
  %v1581 = vunpack.c.0.s8 %v1580
  %v1582 = vlaneseq
  %v1583 = vshrl.u32 %v1582, 7
  %v1584 = vsub.s32 %v1581, %v1583
  %v1585 = vrot.slane %v1571, %v1584
  %v1586 = vcombine.low %v1578, %v1585
  %v1587 = vcombine.low %v1489, %v1493
  %v1588 = vcombine.low %v1497, %v1501
  %v1590 = vunpack.c.l.s4 1983009808
  %v1591 = vunpack.c.0.s8 %v1590
  %v1592 = vlaneseq
  %v1593 = vshrl.u32 %v1592, 7
  %v1594 = vsub.s32 %v1591, %v1593
  %v1595 = vrot.slane %v1587, %v1594
  %v1597 = vunpack.c.l.s4 1983009808
  %v1598 = vunpack.c.0.s8 %v1597
  %v1599 = vlaneseq
  %v1600 = vshrl.u32 %v1599, 7
  %v1601 = vsub.s32 %v1598, %v1600
  %v1602 = vrot.slane %v1588, %v1601
  %v1603 = vcombine.low %v1595, %v1602
  %v1604 = vcombine.low %v1505, %v1509
  %v1605 = vcombine.low %v1513, %v1517
  %v1607 = vunpack.c.l.s4 1983009808
  %v1608 = vunpack.c.0.s8 %v1607
  %v1609 = vlaneseq
  %v1610 = vshrl.u32 %v1609, 7
  %v1611 = vsub.s32 %v1608, %v1610
  %v1612 = vrot.slane %v1604, %v1611
  %v1614 = vunpack.c.l.s4 1983009808
  %v1615 = vunpack.c.0.s8 %v1614
  %v1616 = vlaneseq
  %v1617 = vshrl.u32 %v1616, 7
  %v1618 = vsub.s32 %v1615, %v1617
  %v1619 = vrot.slane %v1605, %v1618
  %v1620 = vcombine.low %v1612, %v1619
  %v1621 = vcombine.low %v1521, %v1525
  %v1622 = vcombine.low %v1529, %v1533
  %v1624 = vunpack.c.l.s4 1983009808
  %v1625 = vunpack.c.0.s8 %v1624
  %v1626 = vlaneseq
  %v1627 = vshrl.u32 %v1626, 7
  %v1628 = vsub.s32 %v1625, %v1627
  %v1629 = vrot.slane %v1621, %v1628
  %v1631 = vunpack.c.l.s4 1983009808
  %v1632 = vunpack.c.0.s8 %v1631
  %v1633 = vlaneseq
  %v1634 = vshrl.u32 %v1633, 7
  %v1635 = vsub.s32 %v1632, %v1634
  %v1636 = vrot.slane %v1622, %v1635
  %v1637 = vcombine.low %v1629, %v1636
  %v1638 = vcombine.low %v1537, %v1541
  %v1639 = vcombine.low %v1545, %v1549
  %v1641 = vunpack.c.l.s4 1983009808
  %v1642 = vunpack.c.0.s8 %v1641
  %v1643 = vlaneseq
  %v1644 = vshrl.u32 %v1643, 7
  %v1645 = vsub.s32 %v1642, %v1644
  %v1646 = vrot.slane %v1638, %v1645
  %v1648 = vunpack.c.l.s4 1983009808
  %v1649 = vunpack.c.0.s8 %v1648
  %v1650 = vlaneseq
  %v1651 = vshrl.u32 %v1650, 7
  %v1652 = vsub.s32 %v1649, %v1651
  %v1653 = vrot.slane %v1639, %v1652
  %v1654 = vcombine.low %v1646, %v1653
  %v1660 = vsel %vm1465, %v1586, 0.0
  %v1661 = vsel %vm1466, %v1603, 0.0
  %v1662 = vsel %vm1467, %v1620, 0.0
  %v1663 = vsel %vm1468, %v1637, 0.0
  %v1664 = vsel %vm1469, %v1654, 0.0
  %v1670 = vcombine.high %v1660, %v1660
  %v1672 = vunpack.c.l.s4 1983009808
  %v1673 = vunpack.c.0.s8 %v1672
  %v1674 = vlaneseq
  %v1675 = vshrl.u32 %v1674, 7
  %v1676 = vsub.s32 %v1673, %v1675
  %v1677 = vrot.slane %v1660, %v1676
  %v1679 = vunpack.c.l.s4 1983009808
  %v1680 = vunpack.c.0.s8 %v1679
  %v1681 = vlaneseq
  %v1682 = vshrl.u32 %v1681, 7
  %v1683 = vsub.s32 %v1680, %v1682
  %v1684 = vrot.slane %v1670, %v1683
  %v1685 = vcombine.high %v1677, %v1677
  %v1686 = vcombine.high %v1684, %v1684
  %v1687 = vcombine.high %v1661, %v1661
  %v1689 = vunpack.c.l.s4 1983009808
  %v1690 = vunpack.c.0.s8 %v1689
  %v1691 = vlaneseq
  %v1692 = vshrl.u32 %v1691, 7
  %v1693 = vsub.s32 %v1690, %v1692
  %v1694 = vrot.slane %v1661, %v1693
  %v1696 = vunpack.c.l.s4 1983009808
  %v1697 = vunpack.c.0.s8 %v1696
  %v1698 = vlaneseq
  %v1699 = vshrl.u32 %v1698, 7
  %v1700 = vsub.s32 %v1697, %v1699
  %v1701 = vrot.slane %v1687, %v1700
  %v1702 = vcombine.high %v1694, %v1694
  %v1703 = vcombine.high %v1701, %v1701
  %v1704 = vcombine.high %v1662, %v1662
  %v1706 = vunpack.c.l.s4 1983009808
  %v1707 = vunpack.c.0.s8 %v1706
  %v1708 = vlaneseq
  %v1709 = vshrl.u32 %v1708, 7
  %v1710 = vsub.s32 %v1707, %v1709
  %v1711 = vrot.slane %v1662, %v1710
  %v1713 = vunpack.c.l.s4 1983009808
  %v1714 = vunpack.c.0.s8 %v1713
  %v1715 = vlaneseq
  %v1716 = vshrl.u32 %v1715, 7
  %v1717 = vsub.s32 %v1714, %v1716
  %v1718 = vrot.slane %v1704, %v1717
  %v1719 = vcombine.high %v1711, %v1711
  %v1720 = vcombine.high %v1718, %v1718
  %v1721 = vcombine.high %v1663, %v1663
  %v1723 = vunpack.c.l.s4 1983009808
  %v1724 = vunpack.c.0.s8 %v1723
  %v1725 = vlaneseq
  %v1726 = vshrl.u32 %v1725, 7
  %v1727 = vsub.s32 %v1724, %v1726
  %v1728 = vrot.slane %v1663, %v1727
  %v1730 = vunpack.c.l.s4 1983009808
  %v1731 = vunpack.c.0.s8 %v1730
  %v1732 = vlaneseq
  %v1733 = vshrl.u32 %v1732, 7
  %v1734 = vsub.s32 %v1731, %v1733
  %v1735 = vrot.slane %v1721, %v1734
  %v1736 = vcombine.high %v1728, %v1728
  %v1737 = vcombine.high %v1735, %v1735
  %v1738 = vcombine.high %v1664, %v1664
  %v1740 = vunpack.c.l.s4 1983009808
  %v1741 = vunpack.c.0.s8 %v1740
  %v1742 = vlaneseq
  %v1743 = vshrl.u32 %v1742, 7
  %v1744 = vsub.s32 %v1741, %v1743
  %v1745 = vrot.slane %v1664, %v1744
  %v1747 = vunpack.c.l.s4 1983009808
  %v1748 = vunpack.c.0.s8 %v1747
  %v1749 = vlaneseq
  %v1750 = vshrl.u32 %v1749, 7
  %v1751 = vsub.s32 %v1748, %v1750
  %v1752 = vrot.slane %v1738, %v1751
  %v1753 = vcombine.high %v1745, %v1745
  %v1754 = vcombine.high %v1752, %v1752
  %v1775 = vadd.f32 %v1445, %v1677
  %v1776 = vadd.f32 %v1446, %v1685
  %v1777 = vadd.f32 %v1447, %v1684
  %v1778 = vadd.f32 %v1448, %v1686
  %v1779 = vadd.f32 %v1449, %v1694
  %v1780 = vadd.f32 %v1450, %v1702
  %v1781 = vadd.f32 %v1451, %v1701
  %v1782 = vadd.f32 %v1452, %v1703
  %v1783 = vadd.f32 %v1453, %v1711
  %v1784 = vadd.f32 %v1454, %v1719
  %v1785 = vadd.f32 %v1455, %v1718
  %v1786 = vadd.f32 %v1456, %v1720
  %v1787 = vadd.f32 %v1457, %v1728
  %v1788 = vadd.f32 %v1458, %v1736
  %v1789 = vadd.f32 %v1459, %v1735
  %v1790 = vadd.f32 %v1460, %v1737
  %v1791 = vadd.f32 %v1461, %v1745
  %v1792 = vadd.f32 %v1462, %v1753
  %v1793 = vadd.f32 %v1463, %v1752
  %v1794 = vadd.f32 %v1464, %v1754
  %vm1795 = vcmp.eq.s32.totalorder %v14, 5
  %vm1796 = vcmp.eq.s32.totalorder %v15, 5
  %vm1797 = vcmp.eq.s32.totalorder %v16, 5
  %vm1798 = vcmp.eq.s32.totalorder %v17, 5
  %vm1799 = vcmp.eq.s32.totalorder %v18, 5
  %v1800 = vlaneseq
  %v1801 = vshrl.u32 %v1800, 7
  %v1802 = vsub.s32 5, %v1801
  %v1803 = vrot.slane %v19, %v1802
  %v1804 = vlaneseq
  %v1805 = vshrl.u32 %v1804, 7
  %v1806 = vsub.s32 5, %v1805
  %v1807 = vrot.slane %v20, %v1806
  %v1808 = vlaneseq
  %v1809 = vshrl.u32 %v1808, 7
  %v1810 = vsub.s32 5, %v1809
  %v1811 = vrot.slane %v21, %v1810
  %v1812 = vlaneseq
  %v1813 = vshrl.u32 %v1812, 7
  %v1814 = vsub.s32 5, %v1813
  %v1815 = vrot.slane %v22, %v1814
  %v1816 = vlaneseq
  %v1817 = vshrl.u32 %v1816, 7
  %v1818 = vsub.s32 5, %v1817
  %v1819 = vrot.slane %v23, %v1818
  %v1820 = vlaneseq
  %v1821 = vshrl.u32 %v1820, 7
  %v1822 = vsub.s32 5, %v1821
  %v1823 = vrot.slane %v24, %v1822
  %v1824 = vlaneseq
  %v1825 = vshrl.u32 %v1824, 7
  %v1826 = vsub.s32 5, %v1825
  %v1827 = vrot.slane %v25, %v1826
  %v1828 = vlaneseq
  %v1829 = vshrl.u32 %v1828, 7
  %v1830 = vsub.s32 5, %v1829
  %v1831 = vrot.slane %v26, %v1830
  %v1832 = vlaneseq
  %v1833 = vshrl.u32 %v1832, 7
  %v1834 = vsub.s32 5, %v1833
  %v1835 = vrot.slane %v27, %v1834
  %v1836 = vlaneseq
  %v1837 = vshrl.u32 %v1836, 7
  %v1838 = vsub.s32 5, %v1837
  %v1839 = vrot.slane %v28, %v1838
  %v1840 = vlaneseq
  %v1841 = vshrl.u32 %v1840, 7
  %v1842 = vsub.s32 5, %v1841
  %v1843 = vrot.slane %v29, %v1842
  %v1844 = vlaneseq
  %v1845 = vshrl.u32 %v1844, 7
  %v1846 = vsub.s32 5, %v1845
  %v1847 = vrot.slane %v30, %v1846
  %v1848 = vlaneseq
  %v1849 = vshrl.u32 %v1848, 7
  %v1850 = vsub.s32 5, %v1849
  %v1851 = vrot.slane %v31, %v1850
  %v1852 = vlaneseq
  %v1853 = vshrl.u32 %v1852, 7
  %v1854 = vsub.s32 5, %v1853
  %v1855 = vrot.slane %v32, %v1854
  %v1856 = vlaneseq
  %v1857 = vshrl.u32 %v1856, 7
  %v1858 = vsub.s32 5, %v1857
  %v1859 = vrot.slane %v33, %v1858
  %v1860 = vlaneseq
  %v1861 = vshrl.u32 %v1860, 7
  %v1862 = vsub.s32 5, %v1861
  %v1863 = vrot.slane %v34, %v1862
  %v1864 = vlaneseq
  %v1865 = vshrl.u32 %v1864, 7
  %v1866 = vsub.s32 5, %v1865
  %v1867 = vrot.slane %v35, %v1866
  %v1868 = vlaneseq
  %v1869 = vshrl.u32 %v1868, 7
  %v1870 = vsub.s32 5, %v1869
  %v1871 = vrot.slane %v36, %v1870
  %v1872 = vlaneseq
  %v1873 = vshrl.u32 %v1872, 7
  %v1874 = vsub.s32 5, %v1873
  %v1875 = vrot.slane %v37, %v1874
  %v1876 = vlaneseq
  %v1877 = vshrl.u32 %v1876, 7
  %v1878 = vsub.s32 5, %v1877
  %v1879 = vrot.slane %v38, %v1878
  %v1900 = vcombine.low %v1803, %v1807
  %v1901 = vcombine.low %v1811, %v1815
  %v1903 = vunpack.c.l.s4 1983009808
  %v1904 = vunpack.c.0.s8 %v1903
  %v1905 = vlaneseq
  %v1906 = vshrl.u32 %v1905, 7
  %v1907 = vsub.s32 %v1904, %v1906
  %v1908 = vrot.slane %v1900, %v1907
  %v1910 = vunpack.c.l.s4 1983009808
  %v1911 = vunpack.c.0.s8 %v1910
  %v1912 = vlaneseq
  %v1913 = vshrl.u32 %v1912, 7
  %v1914 = vsub.s32 %v1911, %v1913
  %v1915 = vrot.slane %v1901, %v1914
  %v1916 = vcombine.low %v1908, %v1915
  %v1917 = vcombine.low %v1819, %v1823
  %v1918 = vcombine.low %v1827, %v1831
  %v1920 = vunpack.c.l.s4 1983009808
  %v1921 = vunpack.c.0.s8 %v1920
  %v1922 = vlaneseq
  %v1923 = vshrl.u32 %v1922, 7
  %v1924 = vsub.s32 %v1921, %v1923
  %v1925 = vrot.slane %v1917, %v1924
  %v1927 = vunpack.c.l.s4 1983009808
  %v1928 = vunpack.c.0.s8 %v1927
  %v1929 = vlaneseq
  %v1930 = vshrl.u32 %v1929, 7
  %v1931 = vsub.s32 %v1928, %v1930
  %v1932 = vrot.slane %v1918, %v1931
  %v1933 = vcombine.low %v1925, %v1932
  %v1934 = vcombine.low %v1835, %v1839
  %v1935 = vcombine.low %v1843, %v1847
  %v1937 = vunpack.c.l.s4 1983009808
  %v1938 = vunpack.c.0.s8 %v1937
  %v1939 = vlaneseq
  %v1940 = vshrl.u32 %v1939, 7
  %v1941 = vsub.s32 %v1938, %v1940
  %v1942 = vrot.slane %v1934, %v1941
  %v1944 = vunpack.c.l.s4 1983009808
  %v1945 = vunpack.c.0.s8 %v1944
  %v1946 = vlaneseq
  %v1947 = vshrl.u32 %v1946, 7
  %v1948 = vsub.s32 %v1945, %v1947
  %v1949 = vrot.slane %v1935, %v1948
  %v1950 = vcombine.low %v1942, %v1949
  %v1951 = vcombine.low %v1851, %v1855
  %v1952 = vcombine.low %v1859, %v1863
  %v1954 = vunpack.c.l.s4 1983009808
  %v1955 = vunpack.c.0.s8 %v1954
  %v1956 = vlaneseq
  %v1957 = vshrl.u32 %v1956, 7
  %v1958 = vsub.s32 %v1955, %v1957
  %v1959 = vrot.slane %v1951, %v1958
  %v1961 = vunpack.c.l.s4 1983009808
  %v1962 = vunpack.c.0.s8 %v1961
  %v1963 = vlaneseq
  %v1964 = vshrl.u32 %v1963, 7
  %v1965 = vsub.s32 %v1962, %v1964
  %v1966 = vrot.slane %v1952, %v1965
  %v1967 = vcombine.low %v1959, %v1966
  %v1968 = vcombine.low %v1867, %v1871
  %v1969 = vcombine.low %v1875, %v1879
  %v1971 = vunpack.c.l.s4 1983009808
  %v1972 = vunpack.c.0.s8 %v1971
  %v1973 = vlaneseq
  %v1974 = vshrl.u32 %v1973, 7
  %v1975 = vsub.s32 %v1972, %v1974
  %v1976 = vrot.slane %v1968, %v1975
  %v1978 = vunpack.c.l.s4 1983009808
  %v1979 = vunpack.c.0.s8 %v1978
  %v1980 = vlaneseq
  %v1981 = vshrl.u32 %v1980, 7
  %v1982 = vsub.s32 %v1979, %v1981
  %v1983 = vrot.slane %v1969, %v1982
  %v1984 = vcombine.low %v1976, %v1983
  %v1990 = vsel %vm1795, %v1916, 0.0
  %v1991 = vsel %vm1796, %v1933, 0.0
  %v1992 = vsel %vm1797, %v1950, 0.0
  %v1993 = vsel %vm1798, %v1967, 0.0
  %v1994 = vsel %vm1799, %v1984, 0.0
  %v2000 = vcombine.high %v1990, %v1990
  %v2002 = vunpack.c.l.s4 1983009808
  %v2003 = vunpack.c.0.s8 %v2002
  %v2004 = vlaneseq
  %v2005 = vshrl.u32 %v2004, 7
  %v2006 = vsub.s32 %v2003, %v2005
  %v2007 = vrot.slane %v1990, %v2006
  %v2009 = vunpack.c.l.s4 1983009808
  %v2010 = vunpack.c.0.s8 %v2009
  %v2011 = vlaneseq
  %v2012 = vshrl.u32 %v2011, 7
  %v2013 = vsub.s32 %v2010, %v2012
  %v2014 = vrot.slane %v2000, %v2013
  %v2015 = vcombine.high %v2007, %v2007
  %v2016 = vcombine.high %v2014, %v2014
  %v2017 = vcombine.high %v1991, %v1991
  %v2019 = vunpack.c.l.s4 1983009808
  %v2020 = vunpack.c.0.s8 %v2019
  %v2021 = vlaneseq
  %v2022 = vshrl.u32 %v2021, 7
  %v2023 = vsub.s32 %v2020, %v2022
  %v2024 = vrot.slane %v1991, %v2023
  %v2026 = vunpack.c.l.s4 1983009808
  %v2027 = vunpack.c.0.s8 %v2026
  %v2028 = vlaneseq
  %v2029 = vshrl.u32 %v2028, 7
  %v2030 = vsub.s32 %v2027, %v2029
  %v2031 = vrot.slane %v2017, %v2030
  %v2032 = vcombine.high %v2024, %v2024
  %v2033 = vcombine.high %v2031, %v2031
  %v2034 = vcombine.high %v1992, %v1992
  %v2036 = vunpack.c.l.s4 1983009808
  %v2037 = vunpack.c.0.s8 %v2036
  %v2038 = vlaneseq
  %v2039 = vshrl.u32 %v2038, 7
  %v2040 = vsub.s32 %v2037, %v2039
  %v2041 = vrot.slane %v1992, %v2040
  %v2043 = vunpack.c.l.s4 1983009808
  %v2044 = vunpack.c.0.s8 %v2043
  %v2045 = vlaneseq
  %v2046 = vshrl.u32 %v2045, 7
  %v2047 = vsub.s32 %v2044, %v2046
  %v2048 = vrot.slane %v2034, %v2047
  %v2049 = vcombine.high %v2041, %v2041
  %v2050 = vcombine.high %v2048, %v2048
  %v2051 = vcombine.high %v1993, %v1993
  %v2053 = vunpack.c.l.s4 1983009808
  %v2054 = vunpack.c.0.s8 %v2053
  %v2055 = vlaneseq
  %v2056 = vshrl.u32 %v2055, 7
  %v2057 = vsub.s32 %v2054, %v2056
  %v2058 = vrot.slane %v1993, %v2057
  %v2060 = vunpack.c.l.s4 1983009808
  %v2061 = vunpack.c.0.s8 %v2060
  %v2062 = vlaneseq
  %v2063 = vshrl.u32 %v2062, 7
  %v2064 = vsub.s32 %v2061, %v2063
  %v2065 = vrot.slane %v2051, %v2064
  %v2066 = vcombine.high %v2058, %v2058
  %v2067 = vcombine.high %v2065, %v2065
  %v2068 = vcombine.high %v1994, %v1994
  %v2070 = vunpack.c.l.s4 1983009808
  %v2071 = vunpack.c.0.s8 %v2070
  %v2072 = vlaneseq
  %v2073 = vshrl.u32 %v2072, 7
  %v2074 = vsub.s32 %v2071, %v2073
  %v2075 = vrot.slane %v1994, %v2074
  %v2077 = vunpack.c.l.s4 1983009808
  %v2078 = vunpack.c.0.s8 %v2077
  %v2079 = vlaneseq
  %v2080 = vshrl.u32 %v2079, 7
  %v2081 = vsub.s32 %v2078, %v2080
  %v2082 = vrot.slane %v2068, %v2081
  %v2083 = vcombine.high %v2075, %v2075
  %v2084 = vcombine.high %v2082, %v2082
  %v2105 = vadd.f32 %v1775, %v2007
  %v2106 = vadd.f32 %v1776, %v2015
  %v2107 = vadd.f32 %v1777, %v2014
  %v2108 = vadd.f32 %v1778, %v2016
  %v2109 = vadd.f32 %v1779, %v2024
  %v2110 = vadd.f32 %v1780, %v2032
  %v2111 = vadd.f32 %v1781, %v2031
  %v2112 = vadd.f32 %v1782, %v2033
  %v2113 = vadd.f32 %v1783, %v2041
  %v2114 = vadd.f32 %v1784, %v2049
  %v2115 = vadd.f32 %v1785, %v2048
  %v2116 = vadd.f32 %v1786, %v2050
  %v2117 = vadd.f32 %v1787, %v2058
  %v2118 = vadd.f32 %v1788, %v2066
  %v2119 = vadd.f32 %v1789, %v2065
  %v2120 = vadd.f32 %v1790, %v2067
  %v2121 = vadd.f32 %v1791, %v2075
  %v2122 = vadd.f32 %v1792, %v2083
  %v2123 = vadd.f32 %v1793, %v2082
  %v2124 = vadd.f32 %v1794, %v2084
  %v2145 = vcombine.low %v2105, %v2106
  %v2146 = vcombine.low %v2107, %v2108
  %v2148 = vunpack.c.l.s4 1983009808
  %v2149 = vunpack.c.0.s8 %v2148
  %v2150 = vlaneseq
  %v2151 = vshrl.u32 %v2150, 7
  %v2152 = vsub.s32 %v2149, %v2151
  %v2153 = vrot.slane %v2145, %v2152
  %v2155 = vunpack.c.l.s4 1983009808
  %v2156 = vunpack.c.0.s8 %v2155
  %v2157 = vlaneseq
  %v2158 = vshrl.u32 %v2157, 7
  %v2159 = vsub.s32 %v2156, %v2158
  %v2160 = vrot.slane %v2146, %v2159
  %v2161 = vcombine.low %v2153, %v2160
  %v2162 = vcombine.low %v2109, %v2110
  %v2163 = vcombine.low %v2111, %v2112
  %v2165 = vunpack.c.l.s4 1983009808
  %v2166 = vunpack.c.0.s8 %v2165
  %v2167 = vlaneseq
  %v2168 = vshrl.u32 %v2167, 7
  %v2169 = vsub.s32 %v2166, %v2168
  %v2170 = vrot.slane %v2162, %v2169
  %v2172 = vunpack.c.l.s4 1983009808
  %v2173 = vunpack.c.0.s8 %v2172
  %v2174 = vlaneseq
  %v2175 = vshrl.u32 %v2174, 7
  %v2176 = vsub.s32 %v2173, %v2175
  %v2177 = vrot.slane %v2163, %v2176
  %v2178 = vcombine.low %v2170, %v2177
  %v2179 = vcombine.low %v2113, %v2114
  %v2180 = vcombine.low %v2115, %v2116
  %v2182 = vunpack.c.l.s4 1983009808
  %v2183 = vunpack.c.0.s8 %v2182
  %v2184 = vlaneseq
  %v2185 = vshrl.u32 %v2184, 7
  %v2186 = vsub.s32 %v2183, %v2185
  %v2187 = vrot.slane %v2179, %v2186
  %v2189 = vunpack.c.l.s4 1983009808
  %v2190 = vunpack.c.0.s8 %v2189
  %v2191 = vlaneseq
  %v2192 = vshrl.u32 %v2191, 7
  %v2193 = vsub.s32 %v2190, %v2192
  %v2194 = vrot.slane %v2180, %v2193
  %v2195 = vcombine.low %v2187, %v2194
  %v2196 = vcombine.low %v2117, %v2118
  %v2197 = vcombine.low %v2119, %v2120
  %v2199 = vunpack.c.l.s4 1983009808
  %v2200 = vunpack.c.0.s8 %v2199
  %v2201 = vlaneseq
  %v2202 = vshrl.u32 %v2201, 7
  %v2203 = vsub.s32 %v2200, %v2202
  %v2204 = vrot.slane %v2196, %v2203
  %v2206 = vunpack.c.l.s4 1983009808
  %v2207 = vunpack.c.0.s8 %v2206
  %v2208 = vlaneseq
  %v2209 = vshrl.u32 %v2208, 7
  %v2210 = vsub.s32 %v2207, %v2209
  %v2211 = vrot.slane %v2197, %v2210
  %v2212 = vcombine.low %v2204, %v2211
  %v2213 = vcombine.low %v2121, %v2122
  %v2214 = vcombine.low %v2123, %v2124
  %v2216 = vunpack.c.l.s4 1983009808
  %v2217 = vunpack.c.0.s8 %v2216
  %v2218 = vlaneseq
  %v2219 = vshrl.u32 %v2218, 7
  %v2220 = vsub.s32 %v2217, %v2219
  %v2221 = vrot.slane %v2213, %v2220
  %v2223 = vunpack.c.l.s4 1983009808
  %v2224 = vunpack.c.0.s8 %v2223
  %v2225 = vlaneseq
  %v2226 = vshrl.u32 %v2225, 7
  %v2227 = vsub.s32 %v2224, %v2226
  %v2228 = vrot.slane %v2214, %v2227
  %v2229 = vcombine.low %v2221, %v2228
  %2235 = vst [vmem:[%s3] sm:$0xff] %v2161
  %2236 = vst [vmem:[%s3 + $0x8] sm:$0xff] %v2178
  %2237 = vst [vmem:[%s3 + $0x10] sm:$0xff] %v2195
  %2238 = vst [vmem:[%s3 + $0x18] sm:$0xff] %v2212
  %2239 = vst [vmem:[%s3 + $0x20] sm:$0xff] %v2229
  // Predicated region
  $region14: #{embed_layer_forward.1} parent=0 // pred_check
    _
  $region15: #{embed_layer_forward.1} parent=0 // pred_check_branch
    %2241 = sbr.rel (0) target = $region17
  $region16: #{embed_layer_forward.1} parent=0 // pred_region
    _
  $region17: #{embed_layer_forward.1} parent=0 // pred_fallthru
    _
  // Predicated region
  $region18: #{embed_layer_forward.1} parent=0 // pred_check
    _
  $region19: #{embed_layer_forward.1} parent=0 // pred_check_branch
    %2243 = sbr.rel (0) target = $region21
  $region20: #{embed_layer_forward.1} parent=0 // pred_region
    _
  $region21: #{embed_layer_forward.1} parent=0 // pred_fallthru
    _

</llo_original>
